<compile_context>
chip_gen: v5e
topology: v5e:2x2
jax: 0.10.0
libtpu: 0.0.40
codegen_flags: <defaults>
</compile_context>

<pallas_src>
import functools

import jax
import jax.numpy as jnp
from jax.experimental import pallas as pl
from jax.experimental.pallas import tpu as pltpu


# ----------------------------------------------------------------------------
# Kernel
# ----------------------------------------------------------------------------
def adda_mlp_encoder_kernel(
    x_ref,    # (TB, Fp)   bf16 input tile (batch rows, padded features)
    w1_ref,   # (Fp, H1)   bf16, BN scale folded in
    b1_ref,   # (1,  H1)   f32 folded shift
    w2_ref,   # (H1, H2)   bf16, BN scale folded in
    b2_ref,   # (1,  H2)   f32 folded shift
    w3_ref,   # (H2, Ep)   bf16
    b3_ref,   # (1,  Ep)   f32 bias
    o_ref,    # (TB, Ep)   f32 output tile
):
    neg_slope = jnp.float32(0.01)  # nn.LeakyReLU default

    # --- layer 1: Linear (BN folded) + shift + LeakyReLU ------------------
    h = jnp.dot(x_ref[...], w1_ref[...], preferred_element_type=jnp.float32)
    h = h + b1_ref[...]
    h = jnp.where(h > 0, h, neg_slope * h)
    # Dropout (eval mode) == identity.
    # TODO(synk): train-mode dropout (pltpu.prng_* random mask) not implemented.

    # --- layer 2: Linear (BN folded) + shift + LeakyReLU ------------------
    h = jnp.dot(h.astype(jnp.bfloat16), w2_ref[...],
                preferred_element_type=jnp.float32)
    h = h + b2_ref[...]
    h = jnp.where(h > 0, h, neg_slope * h)

    # --- output layer: Linear + ELU(alpha=1) ------------------------------
    h = jnp.dot(h.astype(jnp.bfloat16), w3_ref[...],
                preferred_element_type=jnp.float32)
    h = h + b3_ref[...]
    # ELU tail: exp(min(h,0)) - 1.  (expm1 would be marginally more precise
    # very close to 0, but the difference is ~1e-7 abs — negligible next to
    # the bf16 matmul error budget — and exp lowers on the EUP everywhere.)
    o_ref[...] = jnp.where(h > 0, h, jnp.exp(jnp.minimum(h, 0.0)) - 1.0)


# ----------------------------------------------------------------------------
# Wrapper
# ----------------------------------------------------------------------------
def _round_up(v, m):
    return (v + m - 1) // m * m


@functools.partial(jax.jit, static_argnames=("batch_tile",))
def adda_mlp_encoder(x, params, *, batch_tile=256):
    """Fused MLP encoder forward (eval mode).

    x:      (N, inp_dim) float32
    params: dict with keys w1,s1,b1,w2,s2,b2,w3,b3 (BN already expressed as
            per-feature scale/shift; see make_params).
    """
    n, f = x.shape
    h1 = params["w1"].shape[1]
    h2 = params["w2"].shape[1]
    e = params["w3"].shape[1]

    # ---- tile / padding geometry -----------------------------------------
    # Large batch tile -> good MXU row utilization; multiple of 16 keeps bf16
    # blocks sublane-aligned. Clamp to the (rounded) batch for tiny inputs.
    bt = _round_up(min(batch_tile, _round_up(n, 16)), 16)
    n_pad = _round_up(n, bt)        # ragged batches handled by zero padding
    f_pad = _round_up(f, 128)       # lane-dense contraction dim for layer 1
    e_pad = _round_up(e, 128)       # lane-dense output -> unmasked stores

    # ---- fold BN into weights, cast to bf16, pad ---------------------------
    w1 = (params["w1"] * params["s1"]).astype(jnp.bfloat16)      # (f,  h1)
    w2 = (params["w2"] * params["s2"]).astype(jnp.bfloat16)      # (h1, h2)
    w3 = params["w3"].astype(jnp.bfloat16)                       # (h2, e)
    b1 = params["b1"].astype(jnp.float32)                        # (1,  h1)
    b2 = params["b2"].astype(jnp.float32)                        # (1,  h2)
    b3 = params["b3"].astype(jnp.float32)                        # (1,  e)

    w1 = jnp.pad(w1, ((0, f_pad - f), (0, 0)))
    w3 = jnp.pad(w3, ((0, 0), (0, e_pad - e)))
    b3 = jnp.pad(b3, ((0, 0), (0, e_pad - e)))
    xp = jnp.pad(x.astype(jnp.bfloat16), ((0, n_pad - n), (0, f_pad - f)))

    grid = (n_pad // bt,)

    def row_tile(shape):
        # batch-tiled input/output: block index along batch, full features
        return pl.BlockSpec(shape, lambda i: (i, 0))

    def resident(shape):
        # same block every grid step: weights / biases stay VMEM-resident
        return pl.BlockSpec(shape, lambda i: (0, 0))

    out = pl.pallas_call(
        adda_mlp_encoder_kernel,
        out_shape=jax.ShapeDtypeStruct((n_pad, e_pad), jnp.float32),
        grid_spec=pltpu.PrefetchScalarGridSpec(
            num_scalar_prefetch=0,
            grid=grid,
            in_specs=[
                row_tile((bt, f_pad)),
                resident((f_pad, h1)),
                resident((1, h1)),
                resident((h1, h2)),
                resident((1, h2)),
                resident((h2, e_pad)),
                resident((1, e_pad)),
            ],
            out_specs=row_tile((bt, e_pad)),
        ),
        compiler_params=pltpu.CompilerParams(
            # Batch tiles are independent -> shardable across v7x's two
            # TensorCores whenever the grid has >= 2 steps.
            dimension_semantics=("parallel",),
            # Real footprint is only a few MiB even with double buffering;
            # 32 MiB leaves headroom on v7x's 64 MiB physical VMEM.
            vmem_limit_bytes=32 << 20,
        ),
    )(xp, w1, b1, w2, b2, w3, b3)

    return out[:n, :e]


# ----------------------------------------------------------------------------
# Deterministic parameter construction (synthetic, BN expressed as scale/shift)
# ----------------------------------------------------------------------------
def make_params(key, inp_dim, emb_dim, hidden_layer_sizes=(1024, 512), eps=1e-3):
    # eps=1e-3 matches the module: nn.BatchNorm1d(h, eps=0.001, ...)
    dims = (inp_dim,) + tuple(hidden_layer_sizes) + (emb_dim,)
    keys = jax.random.split(key, 32)
    ki = iter(range(32))

    params = {}
    # hidden layers: Linear + BatchNorm1d expressed as (W, scale, shift)
    for li in range(len(hidden_layer_sizes)):
        din, dout = dims[li], dims[li + 1]
        bound = 1.0 / jnp.sqrt(jnp.float32(din))
        w = jax.random.uniform(keys[next(ki)], (din, dout), jnp.float32, -bound, bound)
        b = jax.random.uniform(keys[next(ki)], (dout,), jnp.float32, -bound, bound)
        gamma = 1.0 + 0.1 * jax.random.normal(keys[next(ki)], (dout,), jnp.float32)
        beta = 0.1 * jax.random.normal(keys[next(ki)], (dout,), jnp.float32)
        r_mean = 0.1 * jax.random.normal(keys[next(ki)], (dout,), jnp.float32)
        r_var = jnp.abs(1.0 + 0.1 * jax.random.normal(keys[next(ki)], (dout,), jnp.float32))
        scale = gamma / jnp.sqrt(r_var + eps)                 # BN scale
        shift = (b - r_mean) * scale + beta                   # bias folded through BN
        params[f"w{li + 1}"] = w
        params[f"s{li + 1}"] = scale.reshape(1, dout)
        params[f"b{li + 1}"] = shift.reshape(1, dout)

    # output layer
    din, dout = dims[-2], dims[-1]
    bound = 1.0 / jnp.sqrt(jnp.float32(din))
    w = jax.random.uniform(keys[next(ki)], (din, dout), jnp.float32, -bound, bound)
    b = jax.random.uniform(keys[next(ki)], (dout,), jnp.float32, -bound, bound)
    params["w3"] = w
    params["b3"] = b.reshape(1, dout)
    return params


# ----------------------------------------------------------------------------
# Pure-JAX references
# ----------------------------------------------------------------------------
def reference_forward(x, params):
    """Full-f32 eval-mode module semantics."""
    h = x @ params["w1"] * params["s1"] + params["b1"]
    h = jnp.where(h > 0, h, 0.01 * h)
    h = h @ params["w2"] * params["s2"] + params["b2"]
    h = jnp.where(h > 0, h, 0.01 * h)
    h = h @ params["w3"] + params["b3"]
    return jnp.where(h > 0, h, jnp.expm1(jnp.minimum(h, 0.0)))


def reference_forward_bf16(x, params):
    """Mirrors the kernel's bf16-inputs / f32-accumulate dot strategy."""
    w1 = (params["w1"] * params["s1"]).astype(jnp.bfloat16)
    w2 = (params["w2"] * params["s2"]).astype(jnp.bfloat16)
    w3 = params["w3"].astype(jnp.bfloat16)
    h = jnp.dot(x.astype(jnp.bfloat16), w1,
                preferred_element_type=jnp.float32) + params["b1"]
    h = jnp.where(h > 0, h, 0.01 * h)
    h = jnp.dot(h.astype(jnp.bfloat16), w2,
                preferred_element_type=jnp.float32) + params["b2"]
    h = jnp.where(h > 0, h, 0.01 * h)
    h = jnp.dot(h.astype(jnp.bfloat16), w3,
                preferred_element_type=jnp.float32) + params["b3"]
    return jnp.where(h > 0, h, jnp.exp(jnp.minimum(h, 0.0)) - 1.0)


if __name__ == "__main__":
    key = jax.random.PRNGKey(0)
    k_x, k_p = jax.random.split(key)

    batch, inp_dim, emb_dim = 24, 64, 32
    hidden = (1024, 512)  # ADDA_ENC_HIDDEN_LAYER_SIZES

    x = jax.random.normal(k_x, (batch, inp_dim), jnp.float32)
    params = make_params(k_p, inp_dim, emb_dim, hidden)

    # Default (large) batch tile -- automatically clamped for the small batch.
    out = jax.block_until_ready(adda_mlp_encoder(x, params))
    # Small tile to exercise the multi-step grid + ragged-batch padding path.
    out_tiled = jax.block_until_ready(adda_mlp_encoder(x, params, batch_tile=16))

    ref_bf16 = reference_forward_bf16(x, params)
    ref_f32 = reference_forward(x, params)

    assert out.shape == (batch, emb_dim)
    assert out_tiled.shape == (batch, emb_dim)

    err_tight = float(jnp.max(jnp.abs(out - ref_bf16)))
    err_f32 = float(jnp.max(jnp.abs(out - ref_f32)))
    assert jnp.allclose(out, ref_bf16, atol=1e-3, rtol=1e-3), (
        f"kernel vs bf16-precision reference: max abs err = {err_tight}"
    )
    assert jnp.allclose(out_tiled, ref_bf16, atol=1e-3, rtol=1e-3), (
        "tiled/padded path mismatch vs bf16-precision reference"
    )
    assert jnp.allclose(out, ref_f32, atol=3e-2, rtol=3e-2), (
        f"kernel vs f32 module reference: max abs err = {err_f32}"
    )
    print("KERNEL_OK")
</pallas_src>

<mosaic_0001>
module attributes {stable_mosaic.version = 11 : i64} {
  func.func @adda_mlp_encoder_kernel(%arg0: i32, %arg1: memref<32x128xbf16, #tpu.memory_space<vmem>>, %arg2: memref<128x1024xbf16, #tpu.memory_space<vmem>>, %arg3: memref<1x1024xf32, #tpu.memory_space<vmem>>, %arg4: memref<1024x512xbf16, #tpu.memory_space<vmem>>, %arg5: memref<1x512xf32, #tpu.memory_space<vmem>>, %arg6: memref<512x128xbf16, #tpu.memory_space<vmem>>, %arg7: memref<1x128xf32, #tpu.memory_space<vmem>>, %arg8: memref<32x128xf32, #tpu.memory_space<vmem>>) attributes {dimension_semantics = [#tpu.dimension_semantics<parallel>], iteration_bounds = array<i64: 1>, scalar_prefetch = 0 : i64, scratch_operands = 0 : i64, tpu.core_type = #tpu.core_type<tc>, window_params = [{transform_indices = @transform_0, window_bounds = array<i64: 32, 128>}, {pipeline_mode = #tpu.pipeline_mode<synchronous>, transform_indices = @transform_1, window_bounds = array<i64: 128, 1024>}, {pipeline_mode = #tpu.pipeline_mode<synchronous>, transform_indices = @transform_2, window_bounds = array<i64: 1, 1024>}, {pipeline_mode = #tpu.pipeline_mode<synchronous>, transform_indices = @transform_3, window_bounds = array<i64: 1024, 512>}, {pipeline_mode = #tpu.pipeline_mode<synchronous>, transform_indices = @transform_4, window_bounds = array<i64: 1, 512>}, {pipeline_mode = #tpu.pipeline_mode<synchronous>, transform_indices = @transform_5, window_bounds = array<i64: 512, 128>}, {pipeline_mode = #tpu.pipeline_mode<synchronous>, transform_indices = @transform_6, window_bounds = array<i64: 1, 128>}, {transform_indices = @transform_7, window_bounds = array<i64: 32, 128>}]} {
    %c0 = arith.constant 0 : index
    %c0_0 = arith.constant 0 : index
    %0 = vector.load %arg1[%c0, %c0_0] : memref<32x128xbf16, #tpu.memory_space<vmem>>, vector<32x128xbf16>
    %c0_1 = arith.constant 0 : index
    %c0_2 = arith.constant 0 : index
    %1 = vector.load %arg2[%c0_1, %c0_2] : memref<128x1024xbf16, #tpu.memory_space<vmem>>, vector<128x1024xbf16>
    %cst = arith.constant dense<0.000000e+00> : vector<32x1024xf32>
    %2 = tpu.matmul %0, %1, %cst {dimension_numbers = #tpu.dot_dimension_numbers<[1], [0], [0], [1], [0, 0, 1, 1], [], []>} : vector<32x128xbf16>, vector<128x1024xbf16>, vector<32x1024xf32> -> vector<32x1024xf32>
    %c0_3 = arith.constant 0 : index
    %c0_4 = arith.constant 0 : index
    %3 = vector.load %arg3[%c0_3, %c0_4] : memref<1x1024xf32, #tpu.memory_space<vmem>>, vector<1x1024xf32>
    %4 = vector.broadcast %3 : vector<1x1024xf32> to vector<32x1024xf32>
    %5 = arith.addf %2, %4 : vector<32x1024xf32>
    %cst_5 = arith.constant 0.000000e+00 : f32
    %6 = vector.broadcast %cst_5 : f32 to vector<32x1024xf32>
    %7 = arith.cmpf ogt, %5, %6 : vector<32x1024xf32>
    %cst_6 = arith.constant 0.00999999977 : f32
    %8 = vector.broadcast %cst_6 : f32 to vector<32x1024xf32>
    %9 = arith.mulf %8, %5 : vector<32x1024xf32>
    %10 = arith.select %7, %5, %9 : vector<32x1024xi1>, vector<32x1024xf32>
    %11 = arith.truncf %10 : vector<32x1024xf32> to vector<32x1024xbf16>
    %c0_7 = arith.constant 0 : index
    %c0_8 = arith.constant 0 : index
    %12 = vector.load %arg4[%c0_7, %c0_8] : memref<1024x512xbf16, #tpu.memory_space<vmem>>, vector<1024x512xbf16>
    %cst_9 = arith.constant dense<0.000000e+00> : vector<32x512xf32>
    %13 = tpu.matmul %11, %12, %cst_9 {dimension_numbers = #tpu.dot_dimension_numbers<[1], [0], [0], [1], [0, 0, 1, 1], [], []>} : vector<32x1024xbf16>, vector<1024x512xbf16>, vector<32x512xf32> -> vector<32x512xf32>
    %c0_10 = arith.constant 0 : index
    %c0_11 = arith.constant 0 : index
    %14 = vector.load %arg5[%c0_10, %c0_11] : memref<1x512xf32, #tpu.memory_space<vmem>>, vector<1x512xf32>
    %15 = vector.broadcast %14 : vector<1x512xf32> to vector<32x512xf32>
    %16 = arith.addf %13, %15 : vector<32x512xf32>
    %cst_12 = arith.constant 0.000000e+00 : f32
    %17 = vector.broadcast %cst_12 : f32 to vector<32x512xf32>
    %18 = arith.cmpf ogt, %16, %17 : vector<32x512xf32>
    %cst_13 = arith.constant 0.00999999977 : f32
    %19 = vector.broadcast %cst_13 : f32 to vector<32x512xf32>
    %20 = arith.mulf %19, %16 : vector<32x512xf32>
    %21 = arith.select %18, %16, %20 : vector<32x512xi1>, vector<32x512xf32>
    %22 = arith.truncf %21 : vector<32x512xf32> to vector<32x512xbf16>
    %c0_14 = arith.constant 0 : index
    %c0_15 = arith.constant 0 : index
    %23 = vector.load %arg6[%c0_14, %c0_15] : memref<512x128xbf16, #tpu.memory_space<vmem>>, vector<512x128xbf16>
    %cst_16 = arith.constant dense<0.000000e+00> : vector<32x128xf32>
    %24 = tpu.matmul %22, %23, %cst_16 {dimension_numbers = #tpu.dot_dimension_numbers<[1], [0], [0], [1], [0, 0, 1, 1], [], []>} : vector<32x512xbf16>, vector<512x128xbf16>, vector<32x128xf32> -> vector<32x128xf32>
    %c0_17 = arith.constant 0 : index
    %c0_18 = arith.constant 0 : index
    %25 = vector.load %arg7[%c0_17, %c0_18] : memref<1x128xf32, #tpu.memory_space<vmem>>, vector<1x128xf32>
    %26 = vector.broadcast %25 : vector<1x128xf32> to vector<32x128xf32>
    %27 = arith.addf %24, %26 : vector<32x128xf32>
    %cst_19 = arith.constant 0.000000e+00 : f32
    %28 = vector.broadcast %cst_19 : f32 to vector<32x128xf32>
    %29 = arith.cmpf ogt, %27, %28 : vector<32x128xf32>
    %cst_20 = arith.constant 0.000000e+00 : f32
    %30 = vector.broadcast %cst_20 : f32 to vector<32x128xf32>
    %31 = arith.minimumf %27, %30 : vector<32x128xf32>
    %32 = math.exp %31 : vector<32x128xf32>
    %cst_21 = arith.constant 1.000000e+00 : f32
    %33 = vector.broadcast %cst_21 : f32 to vector<32x128xf32>
    %34 = arith.subf %32, %33 : vector<32x128xf32>
    %35 = arith.select %29, %27, %34 : vector<32x128xi1>, vector<32x128xf32>
    %c0_22 = arith.constant 0 : index
    %c0_23 = arith.constant 0 : index
    %36 = vector.load %arg8[%c0_22, %c0_23] : memref<32x128xf32, #tpu.memory_space<vmem>>, vector<32x128xf32>
    tpu.vector_store %arg8[%c0_22, %c0_23], %35 {strides = array<i32>} : memref<32x128xf32, #tpu.memory_space<vmem>>, vector<32x128xf32>,
    return
  }
  func.func @transform_0(%arg0: i32) -> (i32, i32) {
    %c0_i32 = arith.constant 0 : i32
    %c0_i32_0 = arith.constant 0 : i32
    return %arg0, %c0_i32 : i32, i32
  }
  func.func @transform_1(%arg0: i32) -> (i32, i32) {
    %c0_i32 = arith.constant 0 : i32
    %c0_i32_0 = arith.constant 0 : i32
    %c0_i32_1 = arith.constant 0 : i32
    return %c0_i32, %c0_i32_0 : i32, i32
  }
  func.func @transform_2(%arg0: i32) -> (i32, i32) {
    %c0_i32 = arith.constant 0 : i32
    %c0_i32_0 = arith.constant 0 : i32
    %c0_i32_1 = arith.constant 0 : i32
    return %c0_i32, %c0_i32_0 : i32, i32
  }
  func.func @transform_3(%arg0: i32) -> (i32, i32) {
    %c0_i32 = arith.constant 0 : i32
    %c0_i32_0 = arith.constant 0 : i32
    %c0_i32_1 = arith.constant 0 : i32
    return %c0_i32, %c0_i32_0 : i32, i32
  }
  func.func @transform_4(%arg0: i32) -> (i32, i32) {
    %c0_i32 = arith.constant 0 : i32
    %c0_i32_0 = arith.constant 0 : i32
    %c0_i32_1 = arith.constant 0 : i32
    return %c0_i32, %c0_i32_0 : i32, i32
  }
  func.func @transform_5(%arg0: i32) -> (i32, i32) {
    %c0_i32 = arith.constant 0 : i32
    %c0_i32_0 = arith.constant 0 : i32
    %c0_i32_1 = arith.constant 0 : i32
    return %c0_i32, %c0_i32_0 : i32, i32
  }
  func.func @transform_6(%arg0: i32) -> (i32, i32) {
    %c0_i32 = arith.constant 0 : i32
    %c0_i32_0 = arith.constant 0 : i32
    %c0_i32_1 = arith.constant 0 : i32
    return %c0_i32, %c0_i32_0 : i32, i32
  }
  func.func @transform_7(%arg0: i32) -> (i32, i32) {
    %c0_i32 = arith.constant 0 : i32
    %c0_i32_0 = arith.constant 0 : i32
    return %arg0, %c0_i32 : i32, i32
  }
}

</mosaic_0001>

<llo_original>
// kernel: adda_mlp_encoder.1
$region0: #{adda_mlp_encoder.1}
  #allocation0 [shape = 'u32[]', space=smem, size = 0x4, offset = 0x4, fixed_abs, tag = 'smem constant byte address 0x4 - core index']
  #allocation1 [shape = 'u32[72,128]{1,0:T(1,128)}', space=vmem, size = 0x9000, scoped, tag = 'internal scratch']
  %s0 = inlined_call_operand.vmem [shape: bf16[32,128], index: 0, kind: input, shape index: {}]
  %s1 = inlined_call_operand.vmem [shape: bf16[128,1024], index: 1, kind: input, shape index: {}]
  %s2 = inlined_call_operand.vmem [shape: f32[1,1024], index: 2, kind: input, shape index: {}]
  %s3 = inlined_call_operand.vmem [shape: bf16[1024,512], index: 3, kind: input, shape index: {}]
  %s4 = inlined_call_operand.vmem [shape: f32[1,512], index: 4, kind: input, shape index: {}]
  %s5 = inlined_call_operand.vmem [shape: bf16[512,128], index: 5, kind: input, shape index: {}]
  %s6 = inlined_call_operand.vmem [shape: f32[1,128], index: 6, kind: input, shape index: {}]
  %s7 = inlined_call_operand.vmem [shape: f32[32,128], index: 7, kind: output, shape index: {}]
  %s8 = sld [smem:[#allocation0]]
  $region38: #{adda_mlp_encoder.1} parent=0
    _
  %s10 = ssub.s32 1, %s8
  %s11 = scalar_select 0, %s10, %s8
  // Predicated region
  $region2: #{adda_mlp_encoder.1} parent=0 // pred_check
    _
  $region3: #{adda_mlp_encoder.1} parent=0 // pred_check_branch
    %13 = sbr.rel (0) target = $region5
  $region4: #{adda_mlp_encoder.1} parent=0 // pred_region
    _
  $region5: #{adda_mlp_encoder.1} parent=0 // pred_fallthru
    _
  // Predicated region
  $region6: #{adda_mlp_encoder.1} parent=0 // pred_check
    _
  $region7: #{adda_mlp_encoder.1} parent=0 // pred_check_branch
    %15 = sbr.rel (0) target = $region9
  $region8: #{adda_mlp_encoder.1} parent=0 // pred_region
    _
  $region9: #{adda_mlp_encoder.1} parent=0 // pred_fallthru
    _
  // Predicated region
  $region10: #{adda_mlp_encoder.1} parent=0 // pred_check
    _
  $region11: #{adda_mlp_encoder.1} parent=0 // pred_check_branch
    %17 = sbr.rel (0) target = $region13
  $region12: #{adda_mlp_encoder.1} parent=0 // pred_region
    _
  $region13: #{adda_mlp_encoder.1} parent=0 // pred_fallthru
    _
  // Predicated region
  $region14: #{adda_mlp_encoder.1} parent=0 // pred_check
    _
  $region15: #{adda_mlp_encoder.1} parent=0 // pred_check_branch
    %19 = sbr.rel (0) target = $region17
  $region16: #{adda_mlp_encoder.1} parent=0 // pred_region
    _
  $region17: #{adda_mlp_encoder.1} parent=0 // pred_fallthru
    _
  // Predicated region
  $region18: #{adda_mlp_encoder.1} parent=0 // pred_check
    _
  $region19: #{adda_mlp_encoder.1} parent=0 // pred_check_branch
    %21 = sbr.rel (0) target = $region21
  $region20: #{adda_mlp_encoder.1} parent=0 // pred_region
    _
  $region21: #{adda_mlp_encoder.1} parent=0 // pred_fallthru
    _
  // Predicated region
  $region22: #{adda_mlp_encoder.1} parent=0 // pred_check
    _
  $region23: #{adda_mlp_encoder.1} parent=0 // pred_check_branch
    %23 = sbr.rel (0) target = $region25
  $region24: #{adda_mlp_encoder.1} parent=0 // pred_region
    _
  $region25: #{adda_mlp_encoder.1} parent=0 // pred_fallthru
    _
  // Predicated region
  $region26: #{adda_mlp_encoder.1} parent=0 // pred_check
    _
  $region27: #{adda_mlp_encoder.1} parent=0 // pred_check_branch
    %25 = sbr.rel (0) target = $region29
  $region28: #{adda_mlp_encoder.1} parent=0 // pred_region
    _
  $region29: #{adda_mlp_encoder.1} parent=0 // pred_fallthru
    _
  %v26 = vld [vmem:[%s0] sm:$0xf]
  %v27 = vld [vmem:[%s0 + $0x4] sm:$0xf]
  %v28 = vld [vmem:[%s0 + $0x8] sm:$0xf]
  %v29 = vld [vmem:[%s0 + $0xc] sm:$0xf]
  %v30 = vld [vmem:[%s1] sm:$0xff]
  %v31 = vld [vmem:[%s1 + $0x8] sm:$0xff]
  %v32 = vld [vmem:[%s1 + $0x10] sm:$0xff]
  %v33 = vld [vmem:[%s1 + $0x18] sm:$0xff]
  %v34 = vld [vmem:[%s1 + $0x20] sm:$0xff]
  %v35 = vld [vmem:[%s1 + $0x28] sm:$0xff]
  %v36 = vld [vmem:[%s1 + $0x30] sm:$0xff]
  %v37 = vld [vmem:[%s1 + $0x38] sm:$0xff]
  %v38 = vld [vmem:[%s1 + $0x40] sm:$0xff]
  %v39 = vld [vmem:[%s1 + $0x48] sm:$0xff]
  %v40 = vld [vmem:[%s1 + $0x50] sm:$0xff]
  %v41 = vld [vmem:[%s1 + $0x58] sm:$0xff]
  %v42 = vld [vmem:[%s1 + $0x60] sm:$0xff]
  %v43 = vld [vmem:[%s1 + $0x68] sm:$0xff]
  %v44 = vld [vmem:[%s1 + $0x70] sm:$0xff]
  %v45 = vld [vmem:[%s1 + $0x78] sm:$0xff]
  %v46 = vld [vmem:[%s1 + $0x80] sm:$0xff]
  %v47 = vld [vmem:[%s1 + $0x88] sm:$0xff]
  %v48 = vld [vmem:[%s1 + $0x90] sm:$0xff]
  %v49 = vld [vmem:[%s1 + $0x98] sm:$0xff]
  %v50 = vld [vmem:[%s1 + $0xa0] sm:$0xff]
  %v51 = vld [vmem:[%s1 + $0xa8] sm:$0xff]
  %v52 = vld [vmem:[%s1 + $0xb0] sm:$0xff]
  %v53 = vld [vmem:[%s1 + $0xb8] sm:$0xff]
  %v54 = vld [vmem:[%s1 + $0xc0] sm:$0xff]
  %v55 = vld [vmem:[%s1 + $0xc8] sm:$0xff]
  %v56 = vld [vmem:[%s1 + $0xd0] sm:$0xff]
  %v57 = vld [vmem:[%s1 + $0xd8] sm:$0xff]
  %v58 = vld [vmem:[%s1 + $0xe0] sm:$0xff]
  %v59 = vld [vmem:[%s1 + $0xe8] sm:$0xff]
  %v60 = vld [vmem:[%s1 + $0xf0] sm:$0xff]
  %v61 = vld [vmem:[%s1 + $0xf8] sm:$0xff]
  %v62 = vld [vmem:[%s1 + $0x100] sm:$0xff]
  %v63 = vld [vmem:[%s1 + $0x108] sm:$0xff]
  %v64 = vld [vmem:[%s1 + $0x110] sm:$0xff]
  %v65 = vld [vmem:[%s1 + $0x118] sm:$0xff]
  %v66 = vld [vmem:[%s1 + $0x120] sm:$0xff]
  %v67 = vld [vmem:[%s1 + $0x128] sm:$0xff]
  %v68 = vld [vmem:[%s1 + $0x130] sm:$0xff]
  %v69 = vld [vmem:[%s1 + $0x138] sm:$0xff]
  %v70 = vld [vmem:[%s1 + $0x140] sm:$0xff]
  %v71 = vld [vmem:[%s1 + $0x148] sm:$0xff]
  %v72 = vld [vmem:[%s1 + $0x150] sm:$0xff]
  %v73 = vld [vmem:[%s1 + $0x158] sm:$0xff]
  %v74 = vld [vmem:[%s1 + $0x160] sm:$0xff]
  %v75 = vld [vmem:[%s1 + $0x168] sm:$0xff]
  %v76 = vld [vmem:[%s1 + $0x170] sm:$0xff]
  %v77 = vld [vmem:[%s1 + $0x178] sm:$0xff]
  %v78 = vld [vmem:[%s1 + $0x180] sm:$0xff]
  %v79 = vld [vmem:[%s1 + $0x188] sm:$0xff]
  %v80 = vld [vmem:[%s1 + $0x190] sm:$0xff]
  %v81 = vld [vmem:[%s1 + $0x198] sm:$0xff]
  %v82 = vld [vmem:[%s1 + $0x1a0] sm:$0xff]
  %v83 = vld [vmem:[%s1 + $0x1a8] sm:$0xff]
  %v84 = vld [vmem:[%s1 + $0x1b0] sm:$0xff]
  %v85 = vld [vmem:[%s1 + $0x1b8] sm:$0xff]
  %v86 = vld [vmem:[%s1 + $0x1c0] sm:$0xff]
  %v87 = vld [vmem:[%s1 + $0x1c8] sm:$0xff]
  %v88 = vld [vmem:[%s1 + $0x1d0] sm:$0xff]
  %v89 = vld [vmem:[%s1 + $0x1d8] sm:$0xff]
  %v90 = vld [vmem:[%s1 + $0x1e0] sm:$0xff]
  %v91 = vld [vmem:[%s1 + $0x1e8] sm:$0xff]
  %v92 = vld [vmem:[%s1 + $0x1f0] sm:$0xff]
  %v93 = vld [vmem:[%s1 + $0x1f8] sm:$0xff]
  %v94 = vld [vmem:[%s2] sm:$0xff]
  %v96 = vperm.slane %v94, 0
  %v97 = vperm.slane %v94, 1
  %v98 = vperm.slane %v94, 2
  %v99 = vperm.slane %v94, 3
  %v100 = vperm.slane %v94, 4
  %v101 = vperm.slane %v94, 5
  %v102 = vperm.slane %v94, 6
  %v103 = vperm.slane %v94, 7
  %v116 = vunpack.c.l.b16 %v26
  %v117 = vunpack.c.l.b16 %v27
  %v118 = vunpack.c.l.b16 %v28
  %v119 = vunpack.c.l.b16 %v29
  %v120 = vpack.c.b16 %v117, %v116
  %v121 = vpack.c.b16 %v119, %v118
  %v188 = vunpack.c.l.b16 %v30
  %v189 = vunpack.c.h.b16 %v30
  %v190 = vunpack.c.l.b16 %v31
  %v191 = vunpack.c.h.b16 %v31
  %v192 = vunpack.c.l.b16 %v32
  %v193 = vunpack.c.h.b16 %v32
  %v194 = vunpack.c.l.b16 %v33
  %v195 = vunpack.c.h.b16 %v33
  %v196 = vunpack.c.l.b16 %v34
  %v197 = vunpack.c.h.b16 %v34
  %v198 = vunpack.c.l.b16 %v35
  %v199 = vunpack.c.h.b16 %v35
  %v200 = vunpack.c.l.b16 %v36
  %v201 = vunpack.c.h.b16 %v36
  %v202 = vunpack.c.l.b16 %v37
  %v203 = vunpack.c.h.b16 %v37
  %v204 = vunpack.c.l.b16 %v38
  %v205 = vunpack.c.h.b16 %v38
  %v206 = vunpack.c.l.b16 %v39
  %v207 = vunpack.c.h.b16 %v39
  %v208 = vunpack.c.l.b16 %v40
  %v209 = vunpack.c.h.b16 %v40
  %v210 = vunpack.c.l.b16 %v41
  %v211 = vunpack.c.h.b16 %v41
  %v212 = vunpack.c.l.b16 %v42
  %v213 = vunpack.c.h.b16 %v42
  %v214 = vunpack.c.l.b16 %v43
  %v215 = vunpack.c.h.b16 %v43
  %v216 = vunpack.c.l.b16 %v44
  %v217 = vunpack.c.h.b16 %v44
  %v218 = vunpack.c.l.b16 %v45
  %v219 = vunpack.c.h.b16 %v45
  %v220 = vunpack.c.l.b16 %v46
  %v221 = vunpack.c.h.b16 %v46
  %v222 = vunpack.c.l.b16 %v47
  %v223 = vunpack.c.h.b16 %v47
  %v224 = vunpack.c.l.b16 %v48
  %v225 = vunpack.c.h.b16 %v48
  %v226 = vunpack.c.l.b16 %v49
  %v227 = vunpack.c.h.b16 %v49
  %v228 = vunpack.c.l.b16 %v50
  %v229 = vunpack.c.h.b16 %v50
  %v230 = vunpack.c.l.b16 %v51
  %v231 = vunpack.c.h.b16 %v51
  %v232 = vunpack.c.l.b16 %v52
  %v233 = vunpack.c.h.b16 %v52
  %v234 = vunpack.c.l.b16 %v53
  %v235 = vunpack.c.h.b16 %v53
  %v236 = vunpack.c.l.b16 %v54
  %v237 = vunpack.c.h.b16 %v54
  %v238 = vunpack.c.l.b16 %v55
  %v239 = vunpack.c.h.b16 %v55
  %v240 = vunpack.c.l.b16 %v56
  %v241 = vunpack.c.h.b16 %v56
  %v242 = vunpack.c.l.b16 %v57
  %v243 = vunpack.c.h.b16 %v57
  %v244 = vunpack.c.l.b16 %v58
  %v245 = vunpack.c.h.b16 %v58
  %v246 = vunpack.c.l.b16 %v59
  %v247 = vunpack.c.h.b16 %v59
  %v248 = vunpack.c.l.b16 %v60
  %v249 = vunpack.c.h.b16 %v60
  %v250 = vunpack.c.l.b16 %v61
  %v251 = vunpack.c.h.b16 %v61
  %v252 = vunpack.c.l.b16 %v62
  %v253 = vunpack.c.h.b16 %v62
  %v254 = vunpack.c.l.b16 %v63
  %v255 = vunpack.c.h.b16 %v63
  %v256 = vunpack.c.l.b16 %v64
  %v257 = vunpack.c.h.b16 %v64
  %v258 = vunpack.c.l.b16 %v65
  %v259 = vunpack.c.h.b16 %v65
  %v260 = vunpack.c.l.b16 %v66
  %v261 = vunpack.c.h.b16 %v66
  %v262 = vunpack.c.l.b16 %v67
  %v263 = vunpack.c.h.b16 %v67
  %v264 = vunpack.c.l.b16 %v68
  %v265 = vunpack.c.h.b16 %v68
  %v266 = vunpack.c.l.b16 %v69
  %v267 = vunpack.c.h.b16 %v69
  %v268 = vunpack.c.l.b16 %v70
  %v269 = vunpack.c.h.b16 %v70
  %v270 = vunpack.c.l.b16 %v71
  %v271 = vunpack.c.h.b16 %v71
  %v272 = vunpack.c.l.b16 %v72
  %v273 = vunpack.c.h.b16 %v72
  %v274 = vunpack.c.l.b16 %v73
  %v275 = vunpack.c.h.b16 %v73
  %v276 = vunpack.c.l.b16 %v74
  %v277 = vunpack.c.h.b16 %v74
  %v278 = vunpack.c.l.b16 %v75
  %v279 = vunpack.c.h.b16 %v75
  %v280 = vunpack.c.l.b16 %v76
  %v281 = vunpack.c.h.b16 %v76
  %v282 = vunpack.c.l.b16 %v77
  %v283 = vunpack.c.h.b16 %v77
  %v284 = vunpack.c.l.b16 %v78
  %v285 = vunpack.c.h.b16 %v78
  %v286 = vunpack.c.l.b16 %v79
  %v287 = vunpack.c.h.b16 %v79
  %v288 = vunpack.c.l.b16 %v80
  %v289 = vunpack.c.h.b16 %v80
  %v290 = vunpack.c.l.b16 %v81
  %v291 = vunpack.c.h.b16 %v81
  %v292 = vunpack.c.l.b16 %v82
  %v293 = vunpack.c.h.b16 %v82
  %v294 = vunpack.c.l.b16 %v83
  %v295 = vunpack.c.h.b16 %v83
  %v296 = vunpack.c.l.b16 %v84
  %v297 = vunpack.c.h.b16 %v84
  %v298 = vunpack.c.l.b16 %v85
  %v299 = vunpack.c.h.b16 %v85
  %v300 = vunpack.c.l.b16 %v86
  %v301 = vunpack.c.h.b16 %v86
  %v302 = vunpack.c.l.b16 %v87
  %v303 = vunpack.c.h.b16 %v87
  %v304 = vunpack.c.l.b16 %v88
  %v305 = vunpack.c.h.b16 %v88
  %v306 = vunpack.c.l.b16 %v89
  %v307 = vunpack.c.h.b16 %v89
  %v308 = vunpack.c.l.b16 %v90
  %v309 = vunpack.c.h.b16 %v90
  %v310 = vunpack.c.l.b16 %v91
  %v311 = vunpack.c.h.b16 %v91
  %v312 = vunpack.c.l.b16 %v92
  %v313 = vunpack.c.h.b16 %v92
  %v314 = vunpack.c.l.b16 %v93
  %v315 = vunpack.c.h.b16 %v93
  %v316 = vpack.c.b16 %v196, %v188
  %v317 = vpack.c.b16 %v197, %v189
  %v318 = vpack.c.b16 %v198, %v190
  %v319 = vpack.c.b16 %v199, %v191
  %v320 = vpack.c.b16 %v200, %v192
  %v321 = vpack.c.b16 %v201, %v193
  %v322 = vpack.c.b16 %v202, %v194
  %v323 = vpack.c.b16 %v203, %v195
  %v324 = vpack.c.b16 %v212, %v204
  %v325 = vpack.c.b16 %v213, %v205
  %v326 = vpack.c.b16 %v214, %v206
  %v327 = vpack.c.b16 %v215, %v207
  %v328 = vpack.c.b16 %v216, %v208
  %v329 = vpack.c.b16 %v217, %v209
  %v330 = vpack.c.b16 %v218, %v210
  %v331 = vpack.c.b16 %v219, %v211
  %v332 = vpack.c.b16 %v228, %v220
  %v333 = vpack.c.b16 %v229, %v221
  %v334 = vpack.c.b16 %v230, %v222
  %v335 = vpack.c.b16 %v231, %v223
  %v336 = vpack.c.b16 %v232, %v224
  %v337 = vpack.c.b16 %v233, %v225
  %v338 = vpack.c.b16 %v234, %v226
  %v339 = vpack.c.b16 %v235, %v227
  %v340 = vpack.c.b16 %v244, %v236
  %v341 = vpack.c.b16 %v245, %v237
  %v342 = vpack.c.b16 %v246, %v238
  %v343 = vpack.c.b16 %v247, %v239
  %v344 = vpack.c.b16 %v248, %v240
  %v345 = vpack.c.b16 %v249, %v241
  %v346 = vpack.c.b16 %v250, %v242
  %v347 = vpack.c.b16 %v251, %v243
  %v348 = vpack.c.b16 %v260, %v252
  %v349 = vpack.c.b16 %v261, %v253
  %v350 = vpack.c.b16 %v262, %v254
  %v351 = vpack.c.b16 %v263, %v255
  %v352 = vpack.c.b16 %v264, %v256
  %v353 = vpack.c.b16 %v265, %v257
  %v354 = vpack.c.b16 %v266, %v258
  %v355 = vpack.c.b16 %v267, %v259
  %v356 = vpack.c.b16 %v276, %v268
  %v357 = vpack.c.b16 %v277, %v269
  %v358 = vpack.c.b16 %v278, %v270
  %v359 = vpack.c.b16 %v279, %v271
  %v360 = vpack.c.b16 %v280, %v272
  %v361 = vpack.c.b16 %v281, %v273
  %v362 = vpack.c.b16 %v282, %v274
  %v363 = vpack.c.b16 %v283, %v275
  %v364 = vpack.c.b16 %v292, %v284
  %v365 = vpack.c.b16 %v293, %v285
  %v366 = vpack.c.b16 %v294, %v286
  %v367 = vpack.c.b16 %v295, %v287
  %v368 = vpack.c.b16 %v296, %v288
  %v369 = vpack.c.b16 %v297, %v289
  %v370 = vpack.c.b16 %v298, %v290
  %v371 = vpack.c.b16 %v299, %v291
  %v372 = vpack.c.b16 %v308, %v300
  %v373 = vpack.c.b16 %v309, %v301
  %v374 = vpack.c.b16 %v310, %v302
  %v375 = vpack.c.b16 %v311, %v303
  %v376 = vpack.c.b16 %v312, %v304
  %v377 = vpack.c.b16 %v313, %v305
  %v378 = vpack.c.b16 %v314, %v306
  %v379 = vpack.c.b16 %v315, %v307
  %444 = vmatpush.bf16.msra.mxu0 %v372
  %445 = vmatpush.bf16.msra.mxu0 %v364
  %446 = vmatpush.bf16.msra.mxu0 %v356
  %447 = vmatpush.bf16.msra.mxu0 %v348
  %448 = vmatpush.bf16.msra.mxu0 %v340
  %449 = vmatpush.bf16.msra.mxu0 %v332
  %450 = vmatpush.bf16.msra.mxu0 %v324
  %451 = vmatpush.bf16.msra.mxu0 %v316
  %452 = vmatmul.bf16.gmra.mxu0 %v120
  %v453 = vpop.f32.mrf.mxu0
  %v454 = vadd.f32 %v96, %v453
  %v455 = vpop.f32.mrf.mxu0
  %v456 = vadd.f32 %v96, %v455
  %457 = vmatmul.bf16.gmra.mxu0 %v121
  %v458 = vpop.f32.mrf.mxu0
  %v459 = vadd.f32 %v96, %v458
  %v460 = vpop.f32.mrf.mxu0
  %v461 = vadd.f32 %v96, %v460
  %462 = vdwg.mxu0
  %463 = vmatpush.bf16.msra.mxu0 %v373
  %464 = vmatpush.bf16.msra.mxu0 %v365
  %465 = vmatpush.bf16.msra.mxu0 %v357
  %466 = vmatpush.bf16.msra.mxu0 %v349
  %467 = vmatpush.bf16.msra.mxu0 %v341
  %468 = vmatpush.bf16.msra.mxu0 %v333
  %469 = vmatpush.bf16.msra.mxu0 %v325
  %470 = vmatpush.bf16.msra.mxu0 %v317
  %471 = vmatmul.bf16.gmra.mxu0 %v120
  %v472 = vpop.f32.mrf.mxu0
  %v473 = vadd.f32 %v97, %v472
  %v474 = vpop.f32.mrf.mxu0
  %v475 = vadd.f32 %v97, %v474
  %476 = vmatmul.bf16.gmra.mxu0 %v121
  %v477 = vpop.f32.mrf.mxu0
  %v478 = vadd.f32 %v97, %v477
  %v479 = vpop.f32.mrf.mxu0
  %v480 = vadd.f32 %v97, %v479
  %481 = vdwg.mxu0
  %482 = vmatpush.bf16.msra.mxu0 %v374
  %483 = vmatpush.bf16.msra.mxu0 %v366
  %484 = vmatpush.bf16.msra.mxu0 %v358
  %485 = vmatpush.bf16.msra.mxu0 %v350
  %486 = vmatpush.bf16.msra.mxu0 %v342
  %487 = vmatpush.bf16.msra.mxu0 %v334
  %488 = vmatpush.bf16.msra.mxu0 %v326
  %489 = vmatpush.bf16.msra.mxu0 %v318
  %490 = vmatmul.bf16.gmra.mxu0 %v120
  %v491 = vpop.f32.mrf.mxu0
  %v492 = vadd.f32 %v98, %v491
  %v493 = vpop.f32.mrf.mxu0
  %v494 = vadd.f32 %v98, %v493
  %495 = vmatmul.bf16.gmra.mxu0 %v121
  %v496 = vpop.f32.mrf.mxu0
  %v497 = vadd.f32 %v98, %v496
  %v498 = vpop.f32.mrf.mxu0
  %v499 = vadd.f32 %v98, %v498
  %500 = vdwg.mxu0
  %501 = vmatpush.bf16.msra.mxu0 %v375
  %502 = vmatpush.bf16.msra.mxu0 %v367
  %503 = vmatpush.bf16.msra.mxu0 %v359
  %504 = vmatpush.bf16.msra.mxu0 %v351
  %505 = vmatpush.bf16.msra.mxu0 %v343
  %506 = vmatpush.bf16.msra.mxu0 %v335
  %507 = vmatpush.bf16.msra.mxu0 %v327
  %508 = vmatpush.bf16.msra.mxu0 %v319
  %509 = vmatmul.bf16.gmra.mxu0 %v120
  %v510 = vpop.f32.mrf.mxu0
  %v511 = vadd.f32 %v99, %v510
  %v512 = vpop.f32.mrf.mxu0
  %v513 = vadd.f32 %v99, %v512
  %514 = vmatmul.bf16.gmra.mxu0 %v121
  %v515 = vpop.f32.mrf.mxu0
  %v516 = vadd.f32 %v99, %v515
  %v517 = vpop.f32.mrf.mxu0
  %v518 = vadd.f32 %v99, %v517
  %519 = vdwg.mxu0
  %520 = vmatpush.bf16.msra.mxu0 %v376
  %521 = vmatpush.bf16.msra.mxu0 %v368
  %522 = vmatpush.bf16.msra.mxu0 %v360
  %523 = vmatpush.bf16.msra.mxu0 %v352
  %524 = vmatpush.bf16.msra.mxu0 %v344
  %525 = vmatpush.bf16.msra.mxu0 %v336
  %526 = vmatpush.bf16.msra.mxu0 %v328
  %527 = vmatpush.bf16.msra.mxu0 %v320
  %528 = vmatmul.bf16.gmra.mxu0 %v120
  %v529 = vpop.f32.mrf.mxu0
  %v530 = vadd.f32 %v100, %v529
  %v531 = vpop.f32.mrf.mxu0
  %v532 = vadd.f32 %v100, %v531
  %533 = vmatmul.bf16.gmra.mxu0 %v121
  %v534 = vpop.f32.mrf.mxu0
  %v535 = vadd.f32 %v100, %v534
  %v536 = vpop.f32.mrf.mxu0
  %v537 = vadd.f32 %v100, %v536
  %538 = vdwg.mxu0
  %539 = vmatpush.bf16.msra.mxu0 %v377
  %540 = vmatpush.bf16.msra.mxu0 %v369
  %541 = vmatpush.bf16.msra.mxu0 %v361
  %542 = vmatpush.bf16.msra.mxu0 %v353
  %543 = vmatpush.bf16.msra.mxu0 %v345
  %544 = vmatpush.bf16.msra.mxu0 %v337
  %545 = vmatpush.bf16.msra.mxu0 %v329
  %546 = vmatpush.bf16.msra.mxu0 %v321
  %547 = vmatmul.bf16.gmra.mxu0 %v120
  %v548 = vpop.f32.mrf.mxu0
  %v549 = vadd.f32 %v101, %v548
  %v550 = vpop.f32.mrf.mxu0
  %v551 = vadd.f32 %v101, %v550
  %552 = vmatmul.bf16.gmra.mxu0 %v121
  %v553 = vpop.f32.mrf.mxu0
  %v554 = vadd.f32 %v101, %v553
  %v555 = vpop.f32.mrf.mxu0
  %v556 = vadd.f32 %v101, %v555
  %557 = vdwg.mxu0
  %558 = vmatpush.bf16.msra.mxu0 %v378
  %559 = vmatpush.bf16.msra.mxu0 %v370
  %560 = vmatpush.bf16.msra.mxu0 %v362
  %561 = vmatpush.bf16.msra.mxu0 %v354
  %562 = vmatpush.bf16.msra.mxu0 %v346
  %563 = vmatpush.bf16.msra.mxu0 %v338
  %564 = vmatpush.bf16.msra.mxu0 %v330
  %565 = vmatpush.bf16.msra.mxu0 %v322
  %566 = vmatmul.bf16.gmra.mxu0 %v120
  %v567 = vpop.f32.mrf.mxu0
  %v568 = vadd.f32 %v102, %v567
  %v569 = vpop.f32.mrf.mxu0
  %v570 = vadd.f32 %v102, %v569
  %571 = vmatmul.bf16.gmra.mxu0 %v121
  %v572 = vpop.f32.mrf.mxu0
  %v573 = vadd.f32 %v102, %v572
  %v574 = vpop.f32.mrf.mxu0
  %v575 = vadd.f32 %v102, %v574
  %576 = vdwg.mxu0
  %577 = vmatpush.bf16.msra.mxu0 %v379
  %578 = vmatpush.bf16.msra.mxu0 %v371
  %579 = vmatpush.bf16.msra.mxu0 %v363
  %580 = vmatpush.bf16.msra.mxu0 %v355
  %581 = vmatpush.bf16.msra.mxu0 %v347
  %582 = vmatpush.bf16.msra.mxu0 %v339
  %583 = vmatpush.bf16.msra.mxu0 %v331
  %584 = vmatpush.bf16.msra.mxu0 %v323
  %585 = vmatmul.bf16.gmra.mxu0 %v120
  %v586 = vpop.f32.mrf.mxu0
  %v587 = vadd.f32 %v103, %v586
  %v588 = vpop.f32.mrf.mxu0
  %v589 = vadd.f32 %v103, %v588
  %590 = vmatmul.bf16.gmra.mxu0 %v121
  %v591 = vpop.f32.mrf.mxu0
  %v592 = vadd.f32 %v103, %v591
  %v593 = vpop.f32.mrf.mxu0
  %v594 = vadd.f32 %v103, %v593
  %595 = vdwg.mxu0
  %vm596 = vcmp.gt.f32.partialorder %v454, 0.0
  %vm597 = vcmp.gt.f32.partialorder %v473, 0.0
  %vm598 = vcmp.gt.f32.partialorder %v492, 0.0
  %vm599 = vcmp.gt.f32.partialorder %v511, 0.0
  %vm600 = vcmp.gt.f32.partialorder %v530, 0.0
  %vm601 = vcmp.gt.f32.partialorder %v549, 0.0
  %vm602 = vcmp.gt.f32.partialorder %v568, 0.0
  %vm603 = vcmp.gt.f32.partialorder %v587, 0.0
  %vm604 = vcmp.gt.f32.partialorder %v456, 0.0
  %vm605 = vcmp.gt.f32.partialorder %v475, 0.0
  %vm606 = vcmp.gt.f32.partialorder %v494, 0.0
  %vm607 = vcmp.gt.f32.partialorder %v513, 0.0
  %vm608 = vcmp.gt.f32.partialorder %v532, 0.0
  %vm609 = vcmp.gt.f32.partialorder %v551, 0.0
  %vm610 = vcmp.gt.f32.partialorder %v570, 0.0
  %vm611 = vcmp.gt.f32.partialorder %v589, 0.0
  %vm612 = vcmp.gt.f32.partialorder %v459, 0.0
  %vm613 = vcmp.gt.f32.partialorder %v478, 0.0
  %vm614 = vcmp.gt.f32.partialorder %v497, 0.0
  %vm615 = vcmp.gt.f32.partialorder %v516, 0.0
  %vm616 = vcmp.gt.f32.partialorder %v535, 0.0
  %vm617 = vcmp.gt.f32.partialorder %v554, 0.0
  %vm618 = vcmp.gt.f32.partialorder %v573, 0.0
  %vm619 = vcmp.gt.f32.partialorder %v592, 0.0
  %vm620 = vcmp.gt.f32.partialorder %v461, 0.0
  %vm621 = vcmp.gt.f32.partialorder %v480, 0.0
  %vm622 = vcmp.gt.f32.partialorder %v499, 0.0
  %vm623 = vcmp.gt.f32.partialorder %v518, 0.0
  %vm624 = vcmp.gt.f32.partialorder %v537, 0.0
  %vm625 = vcmp.gt.f32.partialorder %v556, 0.0
  %vm626 = vcmp.gt.f32.partialorder %v575, 0.0
  %vm627 = vcmp.gt.f32.partialorder %v594, 0.0
  %v628 = vmul.f32 %v454, 0.01
  %v629 = vmul.f32 %v473, 0.01
  %v630 = vmul.f32 %v492, 0.01
  %v631 = vmul.f32 %v511, 0.01
  %v632 = vmul.f32 %v530, 0.01
  %v633 = vmul.f32 %v549, 0.01
  %v634 = vmul.f32 %v568, 0.01
  %v635 = vmul.f32 %v587, 0.01
  %v636 = vmul.f32 %v456, 0.01
  %v637 = vmul.f32 %v475, 0.01
  %v638 = vmul.f32 %v494, 0.01
  %v639 = vmul.f32 %v513, 0.01
  %v640 = vmul.f32 %v532, 0.01
  %v641 = vmul.f32 %v551, 0.01
  %v642 = vmul.f32 %v570, 0.01
  %v643 = vmul.f32 %v589, 0.01
  %v644 = vmul.f32 %v459, 0.01
  %v645 = vmul.f32 %v478, 0.01
  %v646 = vmul.f32 %v497, 0.01
  %v647 = vmul.f32 %v516, 0.01
  %v648 = vmul.f32 %v535, 0.01
  %v649 = vmul.f32 %v554, 0.01
  %v650 = vmul.f32 %v573, 0.01
  %v651 = vmul.f32 %v592, 0.01
  %v652 = vmul.f32 %v461, 0.01
  %v653 = vmul.f32 %v480, 0.01
  %v654 = vmul.f32 %v499, 0.01
  %v655 = vmul.f32 %v518, 0.01
  %v656 = vmul.f32 %v537, 0.01
  %v657 = vmul.f32 %v556, 0.01
  %v658 = vmul.f32 %v575, 0.01
  %v659 = vmul.f32 %v594, 0.01
  %v660 = vsel %vm596, %v454, %v628
  %v661 = vsel %vm597, %v473, %v629
  %v662 = vsel %vm598, %v492, %v630
  %v663 = vsel %vm599, %v511, %v631
  %v664 = vsel %vm600, %v530, %v632
  %v665 = vsel %vm601, %v549, %v633
  %v666 = vsel %vm602, %v568, %v634
  %v667 = vsel %vm603, %v587, %v635
  %v668 = vsel %vm604, %v456, %v636
  %v669 = vsel %vm605, %v475, %v637
  %v670 = vsel %vm606, %v494, %v638
  %v671 = vsel %vm607, %v513, %v639
  %v672 = vsel %vm608, %v532, %v640
  %v673 = vsel %vm609, %v551, %v641
  %v674 = vsel %vm610, %v570, %v642
  %v675 = vsel %vm611, %v589, %v643
  %v676 = vsel %vm612, %v459, %v644
  %v677 = vsel %vm613, %v478, %v645
  %v678 = vsel %vm614, %v497, %v646
  %v679 = vsel %vm615, %v516, %v647
  %v680 = vsel %vm616, %v535, %v648
  %v681 = vsel %vm617, %v554, %v649
  %v682 = vsel %vm618, %v573, %v650
  %v683 = vsel %vm619, %v592, %v651
  %v684 = vsel %vm620, %v461, %v652
  %v685 = vsel %vm621, %v480, %v653
  %v686 = vsel %vm622, %v499, %v654
  %v687 = vsel %vm623, %v518, %v655
  %v688 = vsel %vm624, %v537, %v656
  %v689 = vsel %vm625, %v556, %v657
  %v690 = vsel %vm626, %v575, %v658
  %v691 = vsel %vm627, %v594, %v659
  %v692 = vpack.c.bf16 %v668, %v660
  %v693 = vpack.c.bf16 %v669, %v661
  %v694 = vpack.c.bf16 %v670, %v662
  %v695 = vpack.c.bf16 %v671, %v663
  %v696 = vpack.c.bf16 %v672, %v664
  %v697 = vpack.c.bf16 %v673, %v665
  %v698 = vpack.c.bf16 %v674, %v666
  %v699 = vpack.c.bf16 %v675, %v667
  %v700 = vpack.c.bf16 %v684, %v676
  %v701 = vpack.c.bf16 %v685, %v677
  %v702 = vpack.c.bf16 %v686, %v678
  %v703 = vpack.c.bf16 %v687, %v679
  %v704 = vpack.c.bf16 %v688, %v680
  %v705 = vpack.c.bf16 %v689, %v681
  %v706 = vpack.c.bf16 %v690, %v682
  %v707 = vpack.c.bf16 %v691, %v683
  %v708 = vld [vmem:[%s3] sm:$0xff]
  %v709 = vld [vmem:[%s3 + $0x8] sm:$0xff]
  %v710 = vld [vmem:[%s3 + $0x10] sm:$0xff]
  %v711 = vld [vmem:[%s3 + $0x18] sm:$0xff]
  %v712 = vld [vmem:[%s3 + $0x20] sm:$0xff]
  %v713 = vld [vmem:[%s3 + $0x28] sm:$0xff]
  %v714 = vld [vmem:[%s3 + $0x30] sm:$0xff]
  %v715 = vld [vmem:[%s3 + $0x38] sm:$0xff]
  %v716 = vld [vmem:[%s3 + $0x40] sm:$0xff]
  %v717 = vld [vmem:[%s3 + $0x48] sm:$0xff]
  %v718 = vld [vmem:[%s3 + $0x50] sm:$0xff]
  %v719 = vld [vmem:[%s3 + $0x58] sm:$0xff]
  %v720 = vld [vmem:[%s3 + $0x60] sm:$0xff]
  %v721 = vld [vmem:[%s3 + $0x68] sm:$0xff]
  %v722 = vld [vmem:[%s3 + $0x70] sm:$0xff]
  %v723 = vld [vmem:[%s3 + $0x78] sm:$0xff]
  %v724 = vld [vmem:[%s3 + $0x80] sm:$0xff]
  %v725 = vld [vmem:[%s3 + $0x88] sm:$0xff]
  %v726 = vld [vmem:[%s3 + $0x90] sm:$0xff]
  %v727 = vld [vmem:[%s3 + $0x98] sm:$0xff]
  %v728 = vld [vmem:[%s3 + $0xa0] sm:$0xff]
  %v729 = vld [vmem:[%s3 + $0xa8] sm:$0xff]
  %v730 = vld [vmem:[%s3 + $0xb0] sm:$0xff]
  %v731 = vld [vmem:[%s3 + $0xb8] sm:$0xff]
  %v732 = vld [vmem:[%s3 + $0xc0] sm:$0xff]
  %v733 = vld [vmem:[%s3 + $0xc8] sm:$0xff]
  %v734 = vld [vmem:[%s3 + $0xd0] sm:$0xff]
  %v735 = vld [vmem:[%s3 + $0xd8] sm:$0xff]
  %v736 = vld [vmem:[%s3 + $0xe0] sm:$0xff]
  %v737 = vld [vmem:[%s3 + $0xe8] sm:$0xff]
  %v738 = vld [vmem:[%s3 + $0xf0] sm:$0xff]
  %v739 = vld [vmem:[%s3 + $0xf8] sm:$0xff]
  %v740 = vld [vmem:[%s3 + $0x100] sm:$0xff]
  %v741 = vld [vmem:[%s3 + $0x108] sm:$0xff]
  %v742 = vld [vmem:[%s3 + $0x110] sm:$0xff]
  %v743 = vld [vmem:[%s3 + $0x118] sm:$0xff]
  %v744 = vld [vmem:[%s3 + $0x120] sm:$0xff]
  %v745 = vld [vmem:[%s3 + $0x128] sm:$0xff]
  %v746 = vld [vmem:[%s3 + $0x130] sm:$0xff]
  %v747 = vld [vmem:[%s3 + $0x138] sm:$0xff]
  %v748 = vld [vmem:[%s3 + $0x140] sm:$0xff]
  %v749 = vld [vmem:[%s3 + $0x148] sm:$0xff]
  %v750 = vld [vmem:[%s3 + $0x150] sm:$0xff]
  %v751 = vld [vmem:[%s3 + $0x158] sm:$0xff]
  %v752 = vld [vmem:[%s3 + $0x160] sm:$0xff]
  %v753 = vld [vmem:[%s3 + $0x168] sm:$0xff]
  %v754 = vld [vmem:[%s3 + $0x170] sm:$0xff]
  %v755 = vld [vmem:[%s3 + $0x178] sm:$0xff]
  %v756 = vld [vmem:[%s3 + $0x180] sm:$0xff]
  %v757 = vld [vmem:[%s3 + $0x188] sm:$0xff]
  %v758 = vld [vmem:[%s3 + $0x190] sm:$0xff]
  %v759 = vld [vmem:[%s3 + $0x198] sm:$0xff]
  %v760 = vld [vmem:[%s3 + $0x1a0] sm:$0xff]
  %v761 = vld [vmem:[%s3 + $0x1a8] sm:$0xff]
  %v762 = vld [vmem:[%s3 + $0x1b0] sm:$0xff]
  %v763 = vld [vmem:[%s3 + $0x1b8] sm:$0xff]
  %v764 = vld [vmem:[%s3 + $0x1c0] sm:$0xff]
  %v765 = vld [vmem:[%s3 + $0x1c8] sm:$0xff]
  %v766 = vld [vmem:[%s3 + $0x1d0] sm:$0xff]
  %v767 = vld [vmem:[%s3 + $0x1d8] sm:$0xff]
  %v768 = vld [vmem:[%s3 + $0x1e0] sm:$0xff]
  %v769 = vld [vmem:[%s3 + $0x1e8] sm:$0xff]
  %v770 = vld [vmem:[%s3 + $0x1f0] sm:$0xff]
  %v771 = vld [vmem:[%s3 + $0x1f8] sm:$0xff]
  %v772 = vld [vmem:[%s3 + $0x200] sm:$0xff]
  %v773 = vld [vmem:[%s3 + $0x208] sm:$0xff]
  %v774 = vld [vmem:[%s3 + $0x210] sm:$0xff]
  %v775 = vld [vmem:[%s3 + $0x218] sm:$0xff]
  %v776 = vld [vmem:[%s3 + $0x220] sm:$0xff]
  %v777 = vld [vmem:[%s3 + $0x228] sm:$0xff]
  %v778 = vld [vmem:[%s3 + $0x230] sm:$0xff]
  %v779 = vld [vmem:[%s3 + $0x238] sm:$0xff]
  %v780 = vld [vmem:[%s3 + $0x240] sm:$0xff]
  %v781 = vld [vmem:[%s3 + $0x248] sm:$0xff]
  %v782 = vld [vmem:[%s3 + $0x250] sm:$0xff]
  %v783 = vld [vmem:[%s3 + $0x258] sm:$0xff]
  %v784 = vld [vmem:[%s3 + $0x260] sm:$0xff]
  %v785 = vld [vmem:[%s3 + $0x268] sm:$0xff]
  %v786 = vld [vmem:[%s3 + $0x270] sm:$0xff]
  %v787 = vld [vmem:[%s3 + $0x278] sm:$0xff]
  %v788 = vld [vmem:[%s3 + $0x280] sm:$0xff]
  %v789 = vld [vmem:[%s3 + $0x288] sm:$0xff]
  %v790 = vld [vmem:[%s3 + $0x290] sm:$0xff]
  %v791 = vld [vmem:[%s3 + $0x298] sm:$0xff]
  %v792 = vld [vmem:[%s3 + $0x2a0] sm:$0xff]
  %v793 = vld [vmem:[%s3 + $0x2a8] sm:$0xff]
  %v794 = vld [vmem:[%s3 + $0x2b0] sm:$0xff]
  %v795 = vld [vmem:[%s3 + $0x2b8] sm:$0xff]
  %v796 = vld [vmem:[%s3 + $0x2c0] sm:$0xff]
  %v797 = vld [vmem:[%s3 + $0x2c8] sm:$0xff]
  %v798 = vld [vmem:[%s3 + $0x2d0] sm:$0xff]
  %v799 = vld [vmem:[%s3 + $0x2d8] sm:$0xff]
  %v800 = vld [vmem:[%s3 + $0x2e0] sm:$0xff]
  %v801 = vld [vmem:[%s3 + $0x2e8] sm:$0xff]
  %v802 = vld [vmem:[%s3 + $0x2f0] sm:$0xff]
  %v803 = vld [vmem:[%s3 + $0x2f8] sm:$0xff]
  %v804 = vld [vmem:[%s3 + $0x300] sm:$0xff]
  %v805 = vld [vmem:[%s3 + $0x308] sm:$0xff]
  %v806 = vld [vmem:[%s3 + $0x310] sm:$0xff]
  %v807 = vld [vmem:[%s3 + $0x318] sm:$0xff]
  %v808 = vld [vmem:[%s3 + $0x320] sm:$0xff]
  %v809 = vld [vmem:[%s3 + $0x328] sm:$0xff]
  %v810 = vld [vmem:[%s3 + $0x330] sm:$0xff]
  %v811 = vld [vmem:[%s3 + $0x338] sm:$0xff]
  %v812 = vld [vmem:[%s3 + $0x340] sm:$0xff]
  %v813 = vld [vmem:[%s3 + $0x348] sm:$0xff]
  %v814 = vld [vmem:[%s3 + $0x350] sm:$0xff]
  %v815 = vld [vmem:[%s3 + $0x358] sm:$0xff]
  %v816 = vld [vmem:[%s3 + $0x360] sm:$0xff]
  %v817 = vld [vmem:[%s3 + $0x368] sm:$0xff]
  %v818 = vld [vmem:[%s3 + $0x370] sm:$0xff]
  %v819 = vld [vmem:[%s3 + $0x378] sm:$0xff]
  %v820 = vld [vmem:[%s3 + $0x380] sm:$0xff]
  %v821 = vld [vmem:[%s3 + $0x388] sm:$0xff]
  %v822 = vld [vmem:[%s3 + $0x390] sm:$0xff]
  %v823 = vld [vmem:[%s3 + $0x398] sm:$0xff]
  %v824 = vld [vmem:[%s3 + $0x3a0] sm:$0xff]
  %v825 = vld [vmem:[%s3 + $0x3a8] sm:$0xff]
  %v826 = vld [vmem:[%s3 + $0x3b0] sm:$0xff]
  %v827 = vld [vmem:[%s3 + $0x3b8] sm:$0xff]
  %v828 = vld [vmem:[%s3 + $0x3c0] sm:$0xff]
  %v829 = vld [vmem:[%s3 + $0x3c8] sm:$0xff]
  %v830 = vld [vmem:[%s3 + $0x3d0] sm:$0xff]
  %v831 = vld [vmem:[%s3 + $0x3d8] sm:$0xff]
  %v832 = vld [vmem:[%s3 + $0x3e0] sm:$0xff]
  %v833 = vld [vmem:[%s3 + $0x3e8] sm:$0xff]
  %v834 = vld [vmem:[%s3 + $0x3f0] sm:$0xff]
  %v835 = vld [vmem:[%s3 + $0x3f8] sm:$0xff]
  %v836 = vld [vmem:[%s3 + $0x400] sm:$0xff]
  %v837 = vld [vmem:[%s3 + $0x408] sm:$0xff]
  %v838 = vld [vmem:[%s3 + $0x410] sm:$0xff]
  %v839 = vld [vmem:[%s3 + $0x418] sm:$0xff]
  %v840 = vld [vmem:[%s3 + $0x420] sm:$0xff]
  %v841 = vld [vmem:[%s3 + $0x428] sm:$0xff]
  %v842 = vld [vmem:[%s3 + $0x430] sm:$0xff]
  %v843 = vld [vmem:[%s3 + $0x438] sm:$0xff]
  %v844 = vld [vmem:[%s3 + $0x440] sm:$0xff]
  %v845 = vld [vmem:[%s3 + $0x448] sm:$0xff]
  %v846 = vld [vmem:[%s3 + $0x450] sm:$0xff]
  %v847 = vld [vmem:[%s3 + $0x458] sm:$0xff]
  %v848 = vld [vmem:[%s3 + $0x460] sm:$0xff]
  %v849 = vld [vmem:[%s3 + $0x468] sm:$0xff]
  %v850 = vld [vmem:[%s3 + $0x470] sm:$0xff]
  %v851 = vld [vmem:[%s3 + $0x478] sm:$0xff]
  %v852 = vld [vmem:[%s3 + $0x480] sm:$0xff]
  %v853 = vld [vmem:[%s3 + $0x488] sm:$0xff]
  %v854 = vld [vmem:[%s3 + $0x490] sm:$0xff]
  %v855 = vld [vmem:[%s3 + $0x498] sm:$0xff]
  %v856 = vld [vmem:[%s3 + $0x4a0] sm:$0xff]
  %v857 = vld [vmem:[%s3 + $0x4a8] sm:$0xff]
  %v858 = vld [vmem:[%s3 + $0x4b0] sm:$0xff]
  %v859 = vld [vmem:[%s3 + $0x4b8] sm:$0xff]
  %v860 = vld [vmem:[%s3 + $0x4c0] sm:$0xff]
  %v861 = vld [vmem:[%s3 + $0x4c8] sm:$0xff]
  %v862 = vld [vmem:[%s3 + $0x4d0] sm:$0xff]
  %v863 = vld [vmem:[%s3 + $0x4d8] sm:$0xff]
  %v864 = vld [vmem:[%s3 + $0x4e0] sm:$0xff]
  %v865 = vld [vmem:[%s3 + $0x4e8] sm:$0xff]
  %v866 = vld [vmem:[%s3 + $0x4f0] sm:$0xff]
  %v867 = vld [vmem:[%s3 + $0x4f8] sm:$0xff]
  %v868 = vld [vmem:[%s3 + $0x500] sm:$0xff]
  %v869 = vld [vmem:[%s3 + $0x508] sm:$0xff]
  %v870 = vld [vmem:[%s3 + $0x510] sm:$0xff]
  %v871 = vld [vmem:[%s3 + $0x518] sm:$0xff]
  %v872 = vld [vmem:[%s3 + $0x520] sm:$0xff]
  %v873 = vld [vmem:[%s3 + $0x528] sm:$0xff]
  %v874 = vld [vmem:[%s3 + $0x530] sm:$0xff]
  %v875 = vld [vmem:[%s3 + $0x538] sm:$0xff]
  %v876 = vld [vmem:[%s3 + $0x540] sm:$0xff]
  %v877 = vld [vmem:[%s3 + $0x548] sm:$0xff]
  %v878 = vld [vmem:[%s3 + $0x550] sm:$0xff]
  %v879 = vld [vmem:[%s3 + $0x558] sm:$0xff]
  %v880 = vld [vmem:[%s3 + $0x560] sm:$0xff]
  %v881 = vld [vmem:[%s3 + $0x568] sm:$0xff]
  %v882 = vld [vmem:[%s3 + $0x570] sm:$0xff]
  %v883 = vld [vmem:[%s3 + $0x578] sm:$0xff]
  %v884 = vld [vmem:[%s3 + $0x580] sm:$0xff]
  %v885 = vld [vmem:[%s3 + $0x588] sm:$0xff]
  %v886 = vld [vmem:[%s3 + $0x590] sm:$0xff]
  %v887 = vld [vmem:[%s3 + $0x598] sm:$0xff]
  %v888 = vld [vmem:[%s3 + $0x5a0] sm:$0xff]
  %v889 = vld [vmem:[%s3 + $0x5a8] sm:$0xff]
  %v890 = vld [vmem:[%s3 + $0x5b0] sm:$0xff]
  %v891 = vld [vmem:[%s3 + $0x5b8] sm:$0xff]
  %v892 = vld [vmem:[%s3 + $0x5c0] sm:$0xff]
  %v893 = vld [vmem:[%s3 + $0x5c8] sm:$0xff]
  %v894 = vld [vmem:[%s3 + $0x5d0] sm:$0xff]
  %v895 = vld [vmem:[%s3 + $0x5d8] sm:$0xff]
  %v896 = vld [vmem:[%s3 + $0x5e0] sm:$0xff]
  %v897 = vld [vmem:[%s3 + $0x5e8] sm:$0xff]
  %v898 = vld [vmem:[%s3 + $0x5f0] sm:$0xff]
  %v899 = vld [vmem:[%s3 + $0x5f8] sm:$0xff]
  %v900 = vld [vmem:[%s3 + $0x600] sm:$0xff]
  %v901 = vld [vmem:[%s3 + $0x608] sm:$0xff]
  %v902 = vld [vmem:[%s3 + $0x610] sm:$0xff]
  %v903 = vld [vmem:[%s3 + $0x618] sm:$0xff]
  %v904 = vld [vmem:[%s3 + $0x620] sm:$0xff]
  %v905 = vld [vmem:[%s3 + $0x628] sm:$0xff]
  %v906 = vld [vmem:[%s3 + $0x630] sm:$0xff]
  %v907 = vld [vmem:[%s3 + $0x638] sm:$0xff]
  %v908 = vld [vmem:[%s3 + $0x640] sm:$0xff]
  %v909 = vld [vmem:[%s3 + $0x648] sm:$0xff]
  %v910 = vld [vmem:[%s3 + $0x650] sm:$0xff]
  %v911 = vld [vmem:[%s3 + $0x658] sm:$0xff]
  %v912 = vld [vmem:[%s3 + $0x660] sm:$0xff]
  %v913 = vld [vmem:[%s3 + $0x668] sm:$0xff]
  %v914 = vld [vmem:[%s3 + $0x670] sm:$0xff]
  %v915 = vld [vmem:[%s3 + $0x678] sm:$0xff]
  %v916 = vld [vmem:[%s3 + $0x680] sm:$0xff]
  %v917 = vld [vmem:[%s3 + $0x688] sm:$0xff]
  %v918 = vld [vmem:[%s3 + $0x690] sm:$0xff]
  %v919 = vld [vmem:[%s3 + $0x698] sm:$0xff]
  %v920 = vld [vmem:[%s3 + $0x6a0] sm:$0xff]
  %v921 = vld [vmem:[%s3 + $0x6a8] sm:$0xff]
  %v922 = vld [vmem:[%s3 + $0x6b0] sm:$0xff]
  %v923 = vld [vmem:[%s3 + $0x6b8] sm:$0xff]
  %v924 = vld [vmem:[%s3 + $0x6c0] sm:$0xff]
  %v925 = vld [vmem:[%s3 + $0x6c8] sm:$0xff]
  %v926 = vld [vmem:[%s3 + $0x6d0] sm:$0xff]
  %v927 = vld [vmem:[%s3 + $0x6d8] sm:$0xff]
  %v928 = vld [vmem:[%s3 + $0x6e0] sm:$0xff]
  %v929 = vld [vmem:[%s3 + $0x6e8] sm:$0xff]
  %v930 = vld [vmem:[%s3 + $0x6f0] sm:$0xff]
  %v931 = vld [vmem:[%s3 + $0x6f8] sm:$0xff]
  %v932 = vld [vmem:[%s3 + $0x700] sm:$0xff]
  %v933 = vld [vmem:[%s3 + $0x708] sm:$0xff]
  %v934 = vld [vmem:[%s3 + $0x710] sm:$0xff]
  %v935 = vld [vmem:[%s3 + $0x718] sm:$0xff]
  %v936 = vld [vmem:[%s3 + $0x720] sm:$0xff]
  %v937 = vld [vmem:[%s3 + $0x728] sm:$0xff]
  %v938 = vld [vmem:[%s3 + $0x730] sm:$0xff]
  %v939 = vld [vmem:[%s3 + $0x738] sm:$0xff]
  %v940 = vld [vmem:[%s3 + $0x740] sm:$0xff]
  %v941 = vld [vmem:[%s3 + $0x748] sm:$0xff]
  %v942 = vld [vmem:[%s3 + $0x750] sm:$0xff]
  %v943 = vld [vmem:[%s3 + $0x758] sm:$0xff]
  %v944 = vld [vmem:[%s3 + $0x760] sm:$0xff]
  %v945 = vld [vmem:[%s3 + $0x768] sm:$0xff]
  %v946 = vld [vmem:[%s3 + $0x770] sm:$0xff]
  %v947 = vld [vmem:[%s3 + $0x778] sm:$0xff]
  %v948 = vld [vmem:[%s3 + $0x780] sm:$0xff]
  %v949 = vld [vmem:[%s3 + $0x788] sm:$0xff]
  %v950 = vld [vmem:[%s3 + $0x790] sm:$0xff]
  %v951 = vld [vmem:[%s3 + $0x798] sm:$0xff]
  %v952 = vld [vmem:[%s3 + $0x7a0] sm:$0xff]
  %v953 = vld [vmem:[%s3 + $0x7a8] sm:$0xff]
  %v954 = vld [vmem:[%s3 + $0x7b0] sm:$0xff]
  %v955 = vld [vmem:[%s3 + $0x7b8] sm:$0xff]
  %v956 = vld [vmem:[%s3 + $0x7c0] sm:$0xff]
  %v957 = vld [vmem:[%s3 + $0x7c8] sm:$0xff]
  %v958 = vld [vmem:[%s3 + $0x7d0] sm:$0xff]
  %v959 = vld [vmem:[%s3 + $0x7d8] sm:$0xff]
  %v960 = vld [vmem:[%s3 + $0x7e0] sm:$0xff]
  %v961 = vld [vmem:[%s3 + $0x7e8] sm:$0xff]
  %v962 = vld [vmem:[%s3 + $0x7f0] sm:$0xff]
  %v963 = vld [vmem:[%s3 + $0x7f8] sm:$0xff]
  %v964 = vld [vmem:[%s4] sm:$0xf]
  %v966 = vperm.slane %v964, 0
  %v967 = vperm.slane %v964, 1
  %v968 = vperm.slane %v964, 2
  %v969 = vperm.slane %v964, 3
  %v1230 = vunpack.c.l.b16 %v708
  %v1231 = vunpack.c.h.b16 %v708
  %v1232 = vunpack.c.l.b16 %v709
  %v1233 = vunpack.c.h.b16 %v709
  %v1234 = vunpack.c.l.b16 %v710
  %v1235 = vunpack.c.h.b16 %v710
  %v1236 = vunpack.c.l.b16 %v711
  %v1237 = vunpack.c.h.b16 %v711
  %v1238 = vunpack.c.l.b16 %v712
  %v1239 = vunpack.c.h.b16 %v712
  %v1240 = vunpack.c.l.b16 %v713
  %v1241 = vunpack.c.h.b16 %v713
  %v1242 = vunpack.c.l.b16 %v714
  %v1243 = vunpack.c.h.b16 %v714
  %v1244 = vunpack.c.l.b16 %v715
  %v1245 = vunpack.c.h.b16 %v715
  %v1246 = vunpack.c.l.b16 %v716
  %v1247 = vunpack.c.h.b16 %v716
  %v1248 = vunpack.c.l.b16 %v717
  %v1249 = vunpack.c.h.b16 %v717
  %v1250 = vunpack.c.l.b16 %v718
  %v1251 = vunpack.c.h.b16 %v718
  %v1252 = vunpack.c.l.b16 %v719
  %v1253 = vunpack.c.h.b16 %v719
  %v1254 = vunpack.c.l.b16 %v720
  %v1255 = vunpack.c.h.b16 %v720
  %v1256 = vunpack.c.l.b16 %v721
  %v1257 = vunpack.c.h.b16 %v721
  %v1258 = vunpack.c.l.b16 %v722
  %v1259 = vunpack.c.h.b16 %v722
  %v1260 = vunpack.c.l.b16 %v723
  %v1261 = vunpack.c.h.b16 %v723
  %v1262 = vunpack.c.l.b16 %v724
  %v1263 = vunpack.c.h.b16 %v724
  %v1264 = vunpack.c.l.b16 %v725
  %v1265 = vunpack.c.h.b16 %v725
  %v1266 = vunpack.c.l.b16 %v726
  %v1267 = vunpack.c.h.b16 %v726
  %v1268 = vunpack.c.l.b16 %v727
  %v1269 = vunpack.c.h.b16 %v727
  %v1270 = vunpack.c.l.b16 %v728
  %v1271 = vunpack.c.h.b16 %v728
  %v1272 = vunpack.c.l.b16 %v729
  %v1273 = vunpack.c.h.b16 %v729
  %v1274 = vunpack.c.l.b16 %v730
  %v1275 = vunpack.c.h.b16 %v730
  %v1276 = vunpack.c.l.b16 %v731
  %v1277 = vunpack.c.h.b16 %v731
  %v1278 = vunpack.c.l.b16 %v732
  %v1279 = vunpack.c.h.b16 %v732
  %v1280 = vunpack.c.l.b16 %v733
  %v1281 = vunpack.c.h.b16 %v733
  %v1282 = vunpack.c.l.b16 %v734
  %v1283 = vunpack.c.h.b16 %v734
  %v1284 = vunpack.c.l.b16 %v735
  %v1285 = vunpack.c.h.b16 %v735
  %v1286 = vunpack.c.l.b16 %v736
  %v1287 = vunpack.c.h.b16 %v736
  %v1288 = vunpack.c.l.b16 %v737
  %v1289 = vunpack.c.h.b16 %v737
  %v1290 = vunpack.c.l.b16 %v738
  %v1291 = vunpack.c.h.b16 %v738
  %v1292 = vunpack.c.l.b16 %v739
  %v1293 = vunpack.c.h.b16 %v739
  %v1294 = vunpack.c.l.b16 %v740
  %v1295 = vunpack.c.h.b16 %v740
  %v1296 = vunpack.c.l.b16 %v741
  %v1297 = vunpack.c.h.b16 %v741
  %v1298 = vunpack.c.l.b16 %v742
  %v1299 = vunpack.c.h.b16 %v742
  %v1300 = vunpack.c.l.b16 %v743
  %v1301 = vunpack.c.h.b16 %v743
  %v1302 = vunpack.c.l.b16 %v744
  %v1303 = vunpack.c.h.b16 %v744
  %v1304 = vunpack.c.l.b16 %v745
  %v1305 = vunpack.c.h.b16 %v745
  %v1306 = vunpack.c.l.b16 %v746
  %v1307 = vunpack.c.h.b16 %v746
  %v1308 = vunpack.c.l.b16 %v747
  %v1309 = vunpack.c.h.b16 %v747
  %v1310 = vunpack.c.l.b16 %v748
  %v1311 = vunpack.c.h.b16 %v748
  %v1312 = vunpack.c.l.b16 %v749
  %v1313 = vunpack.c.h.b16 %v749
  %v1314 = vunpack.c.l.b16 %v750
  %v1315 = vunpack.c.h.b16 %v750
  %v1316 = vunpack.c.l.b16 %v751
  %v1317 = vunpack.c.h.b16 %v751
  %v1318 = vunpack.c.l.b16 %v752
  %v1319 = vunpack.c.h.b16 %v752
  %v1320 = vunpack.c.l.b16 %v753
  %v1321 = vunpack.c.h.b16 %v753
  %v1322 = vunpack.c.l.b16 %v754
  %v1323 = vunpack.c.h.b16 %v754
  %v1324 = vunpack.c.l.b16 %v755
  %v1325 = vunpack.c.h.b16 %v755
  %v1326 = vunpack.c.l.b16 %v756
  %v1327 = vunpack.c.h.b16 %v756
  %v1328 = vunpack.c.l.b16 %v757
  %v1329 = vunpack.c.h.b16 %v757
  %v1330 = vunpack.c.l.b16 %v758
  %v1331 = vunpack.c.h.b16 %v758
  %v1332 = vunpack.c.l.b16 %v759
  %v1333 = vunpack.c.h.b16 %v759
  %v1334 = vunpack.c.l.b16 %v760
  %v1335 = vunpack.c.h.b16 %v760
  %v1336 = vunpack.c.l.b16 %v761
  %v1337 = vunpack.c.h.b16 %v761
  %v1338 = vunpack.c.l.b16 %v762
  %v1339 = vunpack.c.h.b16 %v762
  %v1340 = vunpack.c.l.b16 %v763
  %v1341 = vunpack.c.h.b16 %v763
  %v1342 = vunpack.c.l.b16 %v764
  %v1343 = vunpack.c.h.b16 %v764
  %v1344 = vunpack.c.l.b16 %v765
  %v1345 = vunpack.c.h.b16 %v765
  %v1346 = vunpack.c.l.b16 %v766
  %v1347 = vunpack.c.h.b16 %v766
  %v1348 = vunpack.c.l.b16 %v767
  %v1349 = vunpack.c.h.b16 %v767
  %v1350 = vunpack.c.l.b16 %v768
  %v1351 = vunpack.c.h.b16 %v768
  %v1352 = vunpack.c.l.b16 %v769
  %v1353 = vunpack.c.h.b16 %v769
  %v1354 = vunpack.c.l.b16 %v770
  %v1355 = vunpack.c.h.b16 %v770
  %v1356 = vunpack.c.l.b16 %v771
  %v1357 = vunpack.c.h.b16 %v771
  %v1358 = vunpack.c.l.b16 %v772
  %v1359 = vunpack.c.h.b16 %v772
  %v1360 = vunpack.c.l.b16 %v773
  %v1361 = vunpack.c.h.b16 %v773
  %v1362 = vunpack.c.l.b16 %v774
  %v1363 = vunpack.c.h.b16 %v774
  %v1364 = vunpack.c.l.b16 %v775
  %v1365 = vunpack.c.h.b16 %v775
  %v1366 = vunpack.c.l.b16 %v776
  %v1367 = vunpack.c.h.b16 %v776
  %v1368 = vunpack.c.l.b16 %v777
  %v1369 = vunpack.c.h.b16 %v777
  %v1370 = vunpack.c.l.b16 %v778
  %v1371 = vunpack.c.h.b16 %v778
  %v1372 = vunpack.c.l.b16 %v779
  %v1373 = vunpack.c.h.b16 %v779
  %v1374 = vunpack.c.l.b16 %v780
  %v1375 = vunpack.c.h.b16 %v780
  %v1376 = vunpack.c.l.b16 %v781
  %v1377 = vunpack.c.h.b16 %v781
  %v1378 = vunpack.c.l.b16 %v782
  %v1379 = vunpack.c.h.b16 %v782
  %v1380 = vunpack.c.l.b16 %v783
  %v1381 = vunpack.c.h.b16 %v783
  %v1382 = vunpack.c.l.b16 %v784
  %v1383 = vunpack.c.h.b16 %v784
  %v1384 = vunpack.c.l.b16 %v785
  %v1385 = vunpack.c.h.b16 %v785
  %v1386 = vunpack.c.l.b16 %v786
  %v1387 = vunpack.c.h.b16 %v786
  %v1388 = vunpack.c.l.b16 %v787
  %v1389 = vunpack.c.h.b16 %v787
  %v1390 = vunpack.c.l.b16 %v788
  %v1391 = vunpack.c.h.b16 %v788
  %v1392 = vunpack.c.l.b16 %v789
  %v1393 = vunpack.c.h.b16 %v789
  %v1394 = vunpack.c.l.b16 %v790
  %v1395 = vunpack.c.h.b16 %v790
  %v1396 = vunpack.c.l.b16 %v791
  %v1397 = vunpack.c.h.b16 %v791
  %v1398 = vunpack.c.l.b16 %v792
  %v1399 = vunpack.c.h.b16 %v792
  %v1400 = vunpack.c.l.b16 %v793
  %v1401 = vunpack.c.h.b16 %v793
  %v1402 = vunpack.c.l.b16 %v794
  %v1403 = vunpack.c.h.b16 %v794
  %v1404 = vunpack.c.l.b16 %v795
  %v1405 = vunpack.c.h.b16 %v795
  %v1406 = vunpack.c.l.b16 %v796
  %v1407 = vunpack.c.h.b16 %v796
  %v1408 = vunpack.c.l.b16 %v797
  %v1409 = vunpack.c.h.b16 %v797
  %v1410 = vunpack.c.l.b16 %v798
  %v1411 = vunpack.c.h.b16 %v798
  %v1412 = vunpack.c.l.b16 %v799
  %v1413 = vunpack.c.h.b16 %v799
  %v1414 = vunpack.c.l.b16 %v800
  %v1415 = vunpack.c.h.b16 %v800
  %v1416 = vunpack.c.l.b16 %v801
  %v1417 = vunpack.c.h.b16 %v801
  %v1418 = vunpack.c.l.b16 %v802
  %v1419 = vunpack.c.h.b16 %v802
  %v1420 = vunpack.c.l.b16 %v803
  %v1421 = vunpack.c.h.b16 %v803
  %v1422 = vunpack.c.l.b16 %v804
  %v1423 = vunpack.c.h.b16 %v804
  %v1424 = vunpack.c.l.b16 %v805
  %v1425 = vunpack.c.h.b16 %v805
  %v1426 = vunpack.c.l.b16 %v806
  %v1427 = vunpack.c.h.b16 %v806
  %v1428 = vunpack.c.l.b16 %v807
  %v1429 = vunpack.c.h.b16 %v807
  %v1430 = vunpack.c.l.b16 %v808
  %v1431 = vunpack.c.h.b16 %v808
  %v1432 = vunpack.c.l.b16 %v809
  %v1433 = vunpack.c.h.b16 %v809
  %v1434 = vunpack.c.l.b16 %v810
  %v1435 = vunpack.c.h.b16 %v810
  %v1436 = vunpack.c.l.b16 %v811
  %v1437 = vunpack.c.h.b16 %v811
  %v1438 = vunpack.c.l.b16 %v812
  %v1439 = vunpack.c.h.b16 %v812
  %v1440 = vunpack.c.l.b16 %v813
  %v1441 = vunpack.c.h.b16 %v813
  %v1442 = vunpack.c.l.b16 %v814
  %v1443 = vunpack.c.h.b16 %v814
  %v1444 = vunpack.c.l.b16 %v815
  %v1445 = vunpack.c.h.b16 %v815
  %v1446 = vunpack.c.l.b16 %v816
  %v1447 = vunpack.c.h.b16 %v816
  %v1448 = vunpack.c.l.b16 %v817
  %v1449 = vunpack.c.h.b16 %v817
  %v1450 = vunpack.c.l.b16 %v818
  %v1451 = vunpack.c.h.b16 %v818
  %v1452 = vunpack.c.l.b16 %v819
  %v1453 = vunpack.c.h.b16 %v819
  %v1454 = vunpack.c.l.b16 %v820
  %v1455 = vunpack.c.h.b16 %v820
  %v1456 = vunpack.c.l.b16 %v821
  %v1457 = vunpack.c.h.b16 %v821
  %v1458 = vunpack.c.l.b16 %v822
  %v1459 = vunpack.c.h.b16 %v822
  %v1460 = vunpack.c.l.b16 %v823
  %v1461 = vunpack.c.h.b16 %v823
  %v1462 = vunpack.c.l.b16 %v824
  %v1463 = vunpack.c.h.b16 %v824
  %v1464 = vunpack.c.l.b16 %v825
  %v1465 = vunpack.c.h.b16 %v825
  %v1466 = vunpack.c.l.b16 %v826
  %v1467 = vunpack.c.h.b16 %v826
  %v1468 = vunpack.c.l.b16 %v827
  %v1469 = vunpack.c.h.b16 %v827
  %v1470 = vunpack.c.l.b16 %v828
  %v1471 = vunpack.c.h.b16 %v828
  %v1472 = vunpack.c.l.b16 %v829
  %v1473 = vunpack.c.h.b16 %v829
  %v1474 = vunpack.c.l.b16 %v830
  %v1475 = vunpack.c.h.b16 %v830
  %v1476 = vunpack.c.l.b16 %v831
  %v1477 = vunpack.c.h.b16 %v831
  %v1478 = vunpack.c.l.b16 %v832
  %v1479 = vunpack.c.h.b16 %v832
  %v1480 = vunpack.c.l.b16 %v833
  %v1481 = vunpack.c.h.b16 %v833
  %v1482 = vunpack.c.l.b16 %v834
  %v1483 = vunpack.c.h.b16 %v834
  %v1484 = vunpack.c.l.b16 %v835
  %v1485 = vunpack.c.h.b16 %v835
  %v1486 = vunpack.c.l.b16 %v836
  %v1487 = vunpack.c.h.b16 %v836
  %v1488 = vunpack.c.l.b16 %v837
  %v1489 = vunpack.c.h.b16 %v837
  %v1490 = vunpack.c.l.b16 %v838
  %v1491 = vunpack.c.h.b16 %v838
  %v1492 = vunpack.c.l.b16 %v839
  %v1493 = vunpack.c.h.b16 %v839
  %v1494 = vunpack.c.l.b16 %v840
  %v1495 = vunpack.c.h.b16 %v840
  %v1496 = vunpack.c.l.b16 %v841
  %v1497 = vunpack.c.h.b16 %v841
  %v1498 = vunpack.c.l.b16 %v842
  %v1499 = vunpack.c.h.b16 %v842
  %v1500 = vunpack.c.l.b16 %v843
  %v1501 = vunpack.c.h.b16 %v843
  %v1502 = vunpack.c.l.b16 %v844
  %v1503 = vunpack.c.h.b16 %v844
  %v1504 = vunpack.c.l.b16 %v845
  %v1505 = vunpack.c.h.b16 %v845
  %v1506 = vunpack.c.l.b16 %v846
  %v1507 = vunpack.c.h.b16 %v846
  %v1508 = vunpack.c.l.b16 %v847
  %v1509 = vunpack.c.h.b16 %v847
  %v1510 = vunpack.c.l.b16 %v848
  %v1511 = vunpack.c.h.b16 %v848
  %v1512 = vunpack.c.l.b16 %v849
  %v1513 = vunpack.c.h.b16 %v849
  %v1514 = vunpack.c.l.b16 %v850
  %v1515 = vunpack.c.h.b16 %v850
  %v1516 = vunpack.c.l.b16 %v851
  %v1517 = vunpack.c.h.b16 %v851
  %v1518 = vunpack.c.l.b16 %v852
  %v1519 = vunpack.c.h.b16 %v852
  %v1520 = vunpack.c.l.b16 %v853
  %v1521 = vunpack.c.h.b16 %v853
  %v1522 = vunpack.c.l.b16 %v854
  %v1523 = vunpack.c.h.b16 %v854
  %v1524 = vunpack.c.l.b16 %v855
  %v1525 = vunpack.c.h.b16 %v855
  %v1526 = vunpack.c.l.b16 %v856
  %v1527 = vunpack.c.h.b16 %v856
  %v1528 = vunpack.c.l.b16 %v857
  %v1529 = vunpack.c.h.b16 %v857
  %v1530 = vunpack.c.l.b16 %v858
  %v1531 = vunpack.c.h.b16 %v858
  %v1532 = vunpack.c.l.b16 %v859
  %v1533 = vunpack.c.h.b16 %v859
  %v1534 = vunpack.c.l.b16 %v860
  %v1535 = vunpack.c.h.b16 %v860
  %v1536 = vunpack.c.l.b16 %v861
  %v1537 = vunpack.c.h.b16 %v861
  %v1538 = vunpack.c.l.b16 %v862
  %v1539 = vunpack.c.h.b16 %v862
  %v1540 = vunpack.c.l.b16 %v863
  %v1541 = vunpack.c.h.b16 %v863
  %v1542 = vunpack.c.l.b16 %v864
  %v1543 = vunpack.c.h.b16 %v864
  %v1544 = vunpack.c.l.b16 %v865
  %v1545 = vunpack.c.h.b16 %v865
  %v1546 = vunpack.c.l.b16 %v866
  %v1547 = vunpack.c.h.b16 %v866
  %v1548 = vunpack.c.l.b16 %v867
  %v1549 = vunpack.c.h.b16 %v867
  %v1550 = vunpack.c.l.b16 %v868
  %v1551 = vunpack.c.h.b16 %v868
  %v1552 = vunpack.c.l.b16 %v869
  %v1553 = vunpack.c.h.b16 %v869
  %v1554 = vunpack.c.l.b16 %v870
  %v1555 = vunpack.c.h.b16 %v870
  %v1556 = vunpack.c.l.b16 %v871
  %v1557 = vunpack.c.h.b16 %v871
  %v1558 = vunpack.c.l.b16 %v872
  %v1559 = vunpack.c.h.b16 %v872
  %v1560 = vunpack.c.l.b16 %v873
  %v1561 = vunpack.c.h.b16 %v873
  %v1562 = vunpack.c.l.b16 %v874
  %v1563 = vunpack.c.h.b16 %v874
  %v1564 = vunpack.c.l.b16 %v875
  %v1565 = vunpack.c.h.b16 %v875
  %v1566 = vunpack.c.l.b16 %v876
  %v1567 = vunpack.c.h.b16 %v876
  %v1568 = vunpack.c.l.b16 %v877
  %v1569 = vunpack.c.h.b16 %v877
  %v1570 = vunpack.c.l.b16 %v878
  %v1571 = vunpack.c.h.b16 %v878
  %v1572 = vunpack.c.l.b16 %v879
  %v1573 = vunpack.c.h.b16 %v879
  %v1574 = vunpack.c.l.b16 %v880
  %v1575 = vunpack.c.h.b16 %v880
  %v1576 = vunpack.c.l.b16 %v881
  %v1577 = vunpack.c.h.b16 %v881
  %v1578 = vunpack.c.l.b16 %v882
  %v1579 = vunpack.c.h.b16 %v882
  %v1580 = vunpack.c.l.b16 %v883
  %v1581 = vunpack.c.h.b16 %v883
  %v1582 = vunpack.c.l.b16 %v884
  %v1583 = vunpack.c.h.b16 %v884
  %v1584 = vunpack.c.l.b16 %v885
  %v1585 = vunpack.c.h.b16 %v885
  %v1586 = vunpack.c.l.b16 %v886
  %v1587 = vunpack.c.h.b16 %v886
  %v1588 = vunpack.c.l.b16 %v887
  %v1589 = vunpack.c.h.b16 %v887
  %v1590 = vunpack.c.l.b16 %v888
  %v1591 = vunpack.c.h.b16 %v888
  %v1592 = vunpack.c.l.b16 %v889
  %v1593 = vunpack.c.h.b16 %v889
  %v1594 = vunpack.c.l.b16 %v890
  %v1595 = vunpack.c.h.b16 %v890
  %v1596 = vunpack.c.l.b16 %v891
  %v1597 = vunpack.c.h.b16 %v891
  %v1598 = vunpack.c.l.b16 %v892
  %v1599 = vunpack.c.h.b16 %v892
  %v1600 = vunpack.c.l.b16 %v893
  %v1601 = vunpack.c.h.b16 %v893
  %v1602 = vunpack.c.l.b16 %v894
  %v1603 = vunpack.c.h.b16 %v894
  %v1604 = vunpack.c.l.b16 %v895
  %v1605 = vunpack.c.h.b16 %v895
  %v1606 = vunpack.c.l.b16 %v896
  %v1607 = vunpack.c.h.b16 %v896
  %v1608 = vunpack.c.l.b16 %v897
  %v1609 = vunpack.c.h.b16 %v897
  %v1610 = vunpack.c.l.b16 %v898
  %v1611 = vunpack.c.h.b16 %v898
  %v1612 = vunpack.c.l.b16 %v899
  %v1613 = vunpack.c.h.b16 %v899
  %v1614 = vunpack.c.l.b16 %v900
  %v1615 = vunpack.c.h.b16 %v900
  %v1616 = vunpack.c.l.b16 %v901
  %v1617 = vunpack.c.h.b16 %v901
  %v1618 = vunpack.c.l.b16 %v902
  %v1619 = vunpack.c.h.b16 %v902
  %v1620 = vunpack.c.l.b16 %v903
  %v1621 = vunpack.c.h.b16 %v903
  %v1622 = vunpack.c.l.b16 %v904
  %v1623 = vunpack.c.h.b16 %v904
  %v1624 = vunpack.c.l.b16 %v905
  %v1625 = vunpack.c.h.b16 %v905
  %v1626 = vunpack.c.l.b16 %v906
  %v1627 = vunpack.c.h.b16 %v906
  %v1628 = vunpack.c.l.b16 %v907
  %v1629 = vunpack.c.h.b16 %v907
  %v1630 = vunpack.c.l.b16 %v908
  %v1631 = vunpack.c.h.b16 %v908
  %v1632 = vunpack.c.l.b16 %v909
  %v1633 = vunpack.c.h.b16 %v909
  %v1634 = vunpack.c.l.b16 %v910
  %v1635 = vunpack.c.h.b16 %v910
  %v1636 = vunpack.c.l.b16 %v911
  %v1637 = vunpack.c.h.b16 %v911
  %v1638 = vunpack.c.l.b16 %v912
  %v1639 = vunpack.c.h.b16 %v912
  %v1640 = vunpack.c.l.b16 %v913
  %v1641 = vunpack.c.h.b16 %v913
  %v1642 = vunpack.c.l.b16 %v914
  %v1643 = vunpack.c.h.b16 %v914
  %v1644 = vunpack.c.l.b16 %v915
  %v1645 = vunpack.c.h.b16 %v915
  %v1646 = vunpack.c.l.b16 %v916
  %v1647 = vunpack.c.h.b16 %v916
  %v1648 = vunpack.c.l.b16 %v917
  %v1649 = vunpack.c.h.b16 %v917
  %v1650 = vunpack.c.l.b16 %v918
  %v1651 = vunpack.c.h.b16 %v918
  %v1652 = vunpack.c.l.b16 %v919
  %v1653 = vunpack.c.h.b16 %v919
  %v1654 = vunpack.c.l.b16 %v920
  %v1655 = vunpack.c.h.b16 %v920
  %v1656 = vunpack.c.l.b16 %v921
  %v1657 = vunpack.c.h.b16 %v921
  %v1658 = vunpack.c.l.b16 %v922
  %v1659 = vunpack.c.h.b16 %v922
  %v1660 = vunpack.c.l.b16 %v923
  %v1661 = vunpack.c.h.b16 %v923
  %v1662 = vunpack.c.l.b16 %v924
  %v1663 = vunpack.c.h.b16 %v924
  %v1664 = vunpack.c.l.b16 %v925
  %v1665 = vunpack.c.h.b16 %v925
  %v1666 = vunpack.c.l.b16 %v926
  %v1667 = vunpack.c.h.b16 %v926
  %v1668 = vunpack.c.l.b16 %v927
  %v1669 = vunpack.c.h.b16 %v927
  %v1670 = vunpack.c.l.b16 %v928
  %v1671 = vunpack.c.h.b16 %v928
  %v1672 = vunpack.c.l.b16 %v929
  %v1673 = vunpack.c.h.b16 %v929
  %v1674 = vunpack.c.l.b16 %v930
  %v1675 = vunpack.c.h.b16 %v930
  %v1676 = vunpack.c.l.b16 %v931
  %v1677 = vunpack.c.h.b16 %v931
  %v1678 = vunpack.c.l.b16 %v932
  %v1679 = vunpack.c.h.b16 %v932
  %v1680 = vunpack.c.l.b16 %v933
  %v1681 = vunpack.c.h.b16 %v933
  %v1682 = vunpack.c.l.b16 %v934
  %v1683 = vunpack.c.h.b16 %v934
  %v1684 = vunpack.c.l.b16 %v935
  %v1685 = vunpack.c.h.b16 %v935
  %v1686 = vunpack.c.l.b16 %v936
  %v1687 = vunpack.c.h.b16 %v936
  %v1688 = vunpack.c.l.b16 %v937
  %v1689 = vunpack.c.h.b16 %v937
  %v1690 = vunpack.c.l.b16 %v938
  %v1691 = vunpack.c.h.b16 %v938
  %v1692 = vunpack.c.l.b16 %v939
  %v1693 = vunpack.c.h.b16 %v939
  %v1694 = vunpack.c.l.b16 %v940
  %v1695 = vunpack.c.h.b16 %v940
  %v1696 = vunpack.c.l.b16 %v941
  %v1697 = vunpack.c.h.b16 %v941
  %v1698 = vunpack.c.l.b16 %v942
  %v1699 = vunpack.c.h.b16 %v942
  %v1700 = vunpack.c.l.b16 %v943
  %v1701 = vunpack.c.h.b16 %v943
  %v1702 = vunpack.c.l.b16 %v944
  %v1703 = vunpack.c.h.b16 %v944
  %v1704 = vunpack.c.l.b16 %v945
  %v1705 = vunpack.c.h.b16 %v945
  %v1706 = vunpack.c.l.b16 %v946
  %v1707 = vunpack.c.h.b16 %v946
  %v1708 = vunpack.c.l.b16 %v947
  %v1709 = vunpack.c.h.b16 %v947
  %v1710 = vunpack.c.l.b16 %v948
  %v1711 = vunpack.c.h.b16 %v948
  %v1712 = vunpack.c.l.b16 %v949
  %v1713 = vunpack.c.h.b16 %v949
  %v1714 = vunpack.c.l.b16 %v950
  %v1715 = vunpack.c.h.b16 %v950
  %v1716 = vunpack.c.l.b16 %v951
  %v1717 = vunpack.c.h.b16 %v951
  %v1718 = vunpack.c.l.b16 %v952
  %v1719 = vunpack.c.h.b16 %v952
  %v1720 = vunpack.c.l.b16 %v953
  %v1721 = vunpack.c.h.b16 %v953
  %v1722 = vunpack.c.l.b16 %v954
  %v1723 = vunpack.c.h.b16 %v954
  %v1724 = vunpack.c.l.b16 %v955
  %v1725 = vunpack.c.h.b16 %v955
  %v1726 = vunpack.c.l.b16 %v956
  %v1727 = vunpack.c.h.b16 %v956
  %v1728 = vunpack.c.l.b16 %v957
  %v1729 = vunpack.c.h.b16 %v957
  %v1730 = vunpack.c.l.b16 %v958
  %v1731 = vunpack.c.h.b16 %v958
  %v1732 = vunpack.c.l.b16 %v959
  %v1733 = vunpack.c.h.b16 %v959
  %v1734 = vunpack.c.l.b16 %v960
  %v1735 = vunpack.c.h.b16 %v960
  %v1736 = vunpack.c.l.b16 %v961
  %v1737 = vunpack.c.h.b16 %v961
  %v1738 = vunpack.c.l.b16 %v962
  %v1739 = vunpack.c.h.b16 %v962
  %v1740 = vunpack.c.l.b16 %v963
  %v1741 = vunpack.c.h.b16 %v963
  %v1742 = vpack.c.b16 %v1234, %v1230
  %v1743 = vpack.c.b16 %v1235, %v1231
  %v1744 = vpack.c.b16 %v1236, %v1232
  %v1745 = vpack.c.b16 %v1237, %v1233
  %v1746 = vpack.c.b16 %v1242, %v1238
  %v1747 = vpack.c.b16 %v1243, %v1239
  %v1748 = vpack.c.b16 %v1244, %v1240
  %v1749 = vpack.c.b16 %v1245, %v1241
  %v1750 = vpack.c.b16 %v1250, %v1246
  %v1751 = vpack.c.b16 %v1251, %v1247
  %v1752 = vpack.c.b16 %v1252, %v1248
  %v1753 = vpack.c.b16 %v1253, %v1249
  %v1754 = vpack.c.b16 %v1258, %v1254
  %v1755 = vpack.c.b16 %v1259, %v1255
  %v1756 = vpack.c.b16 %v1260, %v1256
  %v1757 = vpack.c.b16 %v1261, %v1257
  %v1758 = vpack.c.b16 %v1266, %v1262
  %v1759 = vpack.c.b16 %v1267, %v1263
  %v1760 = vpack.c.b16 %v1268, %v1264
  %v1761 = vpack.c.b16 %v1269, %v1265
  %v1762 = vpack.c.b16 %v1274, %v1270
  %v1763 = vpack.c.b16 %v1275, %v1271
  %v1764 = vpack.c.b16 %v1276, %v1272
  %v1765 = vpack.c.b16 %v1277, %v1273
  %v1766 = vpack.c.b16 %v1282, %v1278
  %v1767 = vpack.c.b16 %v1283, %v1279
  %v1768 = vpack.c.b16 %v1284, %v1280
  %v1769 = vpack.c.b16 %v1285, %v1281
  %v1770 = vpack.c.b16 %v1290, %v1286
  %v1771 = vpack.c.b16 %v1291, %v1287
  %v1772 = vpack.c.b16 %v1292, %v1288
  %v1773 = vpack.c.b16 %v1293, %v1289
  %v1774 = vpack.c.b16 %v1298, %v1294
  %v1775 = vpack.c.b16 %v1299, %v1295
  %v1776 = vpack.c.b16 %v1300, %v1296
  %v1777 = vpack.c.b16 %v1301, %v1297
  %v1778 = vpack.c.b16 %v1306, %v1302
  %v1779 = vpack.c.b16 %v1307, %v1303
  %v1780 = vpack.c.b16 %v1308, %v1304
  %v1781 = vpack.c.b16 %v1309, %v1305
  %v1782 = vpack.c.b16 %v1314, %v1310
  %v1783 = vpack.c.b16 %v1315, %v1311
  %v1784 = vpack.c.b16 %v1316, %v1312
  %v1785 = vpack.c.b16 %v1317, %v1313
  %v1786 = vpack.c.b16 %v1322, %v1318
  %v1787 = vpack.c.b16 %v1323, %v1319
  %v1788 = vpack.c.b16 %v1324, %v1320
  %v1789 = vpack.c.b16 %v1325, %v1321
  %v1790 = vpack.c.b16 %v1330, %v1326
  %v1791 = vpack.c.b16 %v1331, %v1327
  %v1792 = vpack.c.b16 %v1332, %v1328
  %v1793 = vpack.c.b16 %v1333, %v1329
  %v1794 = vpack.c.b16 %v1338, %v1334
  %v1795 = vpack.c.b16 %v1339, %v1335
  %v1796 = vpack.c.b16 %v1340, %v1336
  %v1797 = vpack.c.b16 %v1341, %v1337
  %v1798 = vpack.c.b16 %v1346, %v1342
  %v1799 = vpack.c.b16 %v1347, %v1343
  %v1800 = vpack.c.b16 %v1348, %v1344
  %v1801 = vpack.c.b16 %v1349, %v1345
  %v1802 = vpack.c.b16 %v1354, %v1350
  %v1803 = vpack.c.b16 %v1355, %v1351
  %v1804 = vpack.c.b16 %v1356, %v1352
  %v1805 = vpack.c.b16 %v1357, %v1353
  %v1806 = vpack.c.b16 %v1362, %v1358
  %v1807 = vpack.c.b16 %v1363, %v1359
  %v1808 = vpack.c.b16 %v1364, %v1360
  %v1809 = vpack.c.b16 %v1365, %v1361
  %v1810 = vpack.c.b16 %v1370, %v1366
  %v1811 = vpack.c.b16 %v1371, %v1367
  %v1812 = vpack.c.b16 %v1372, %v1368
  %v1813 = vpack.c.b16 %v1373, %v1369
  %v1814 = vpack.c.b16 %v1378, %v1374
  %v1815 = vpack.c.b16 %v1379, %v1375
  %v1816 = vpack.c.b16 %v1380, %v1376
  %v1817 = vpack.c.b16 %v1381, %v1377
  %v1818 = vpack.c.b16 %v1386, %v1382
  %v1819 = vpack.c.b16 %v1387, %v1383
  %v1820 = vpack.c.b16 %v1388, %v1384
  %v1821 = vpack.c.b16 %v1389, %v1385
  %v1822 = vpack.c.b16 %v1394, %v1390
  %v1823 = vpack.c.b16 %v1395, %v1391
  %v1824 = vpack.c.b16 %v1396, %v1392
  %v1825 = vpack.c.b16 %v1397, %v1393
  %v1826 = vpack.c.b16 %v1402, %v1398
  %v1827 = vpack.c.b16 %v1403, %v1399
  %v1828 = vpack.c.b16 %v1404, %v1400
  %v1829 = vpack.c.b16 %v1405, %v1401
  %v1830 = vpack.c.b16 %v1410, %v1406
  %v1831 = vpack.c.b16 %v1411, %v1407
  %v1832 = vpack.c.b16 %v1412, %v1408
  %v1833 = vpack.c.b16 %v1413, %v1409
  %v1834 = vpack.c.b16 %v1418, %v1414
  %v1835 = vpack.c.b16 %v1419, %v1415
  %v1836 = vpack.c.b16 %v1420, %v1416
  %v1837 = vpack.c.b16 %v1421, %v1417
  %v1838 = vpack.c.b16 %v1426, %v1422
  %v1839 = vpack.c.b16 %v1427, %v1423
  %v1840 = vpack.c.b16 %v1428, %v1424
  %v1841 = vpack.c.b16 %v1429, %v1425
  %v1842 = vpack.c.b16 %v1434, %v1430
  %v1843 = vpack.c.b16 %v1435, %v1431
  %v1844 = vpack.c.b16 %v1436, %v1432
  %v1845 = vpack.c.b16 %v1437, %v1433
  %v1846 = vpack.c.b16 %v1442, %v1438
  %v1847 = vpack.c.b16 %v1443, %v1439
  %v1848 = vpack.c.b16 %v1444, %v1440
  %v1849 = vpack.c.b16 %v1445, %v1441
  %v1850 = vpack.c.b16 %v1450, %v1446
  %v1851 = vpack.c.b16 %v1451, %v1447
  %v1852 = vpack.c.b16 %v1452, %v1448
  %v1853 = vpack.c.b16 %v1453, %v1449
  %v1854 = vpack.c.b16 %v1458, %v1454
  %v1855 = vpack.c.b16 %v1459, %v1455
  %v1856 = vpack.c.b16 %v1460, %v1456
  %v1857 = vpack.c.b16 %v1461, %v1457
  %v1858 = vpack.c.b16 %v1466, %v1462
  %v1859 = vpack.c.b16 %v1467, %v1463
  %v1860 = vpack.c.b16 %v1468, %v1464
  %v1861 = vpack.c.b16 %v1469, %v1465
  %v1862 = vpack.c.b16 %v1474, %v1470
  %v1863 = vpack.c.b16 %v1475, %v1471
  %v1864 = vpack.c.b16 %v1476, %v1472
  %v1865 = vpack.c.b16 %v1477, %v1473
  %v1866 = vpack.c.b16 %v1482, %v1478
  %v1867 = vpack.c.b16 %v1483, %v1479
  %v1868 = vpack.c.b16 %v1484, %v1480
  %v1869 = vpack.c.b16 %v1485, %v1481
  %v1870 = vpack.c.b16 %v1490, %v1486
  %v1871 = vpack.c.b16 %v1491, %v1487
  %v1872 = vpack.c.b16 %v1492, %v1488
  %v1873 = vpack.c.b16 %v1493, %v1489
  %v1874 = vpack.c.b16 %v1498, %v1494
  %v1875 = vpack.c.b16 %v1499, %v1495
  %v1876 = vpack.c.b16 %v1500, %v1496
  %v1877 = vpack.c.b16 %v1501, %v1497
  %v1878 = vpack.c.b16 %v1506, %v1502
  %v1879 = vpack.c.b16 %v1507, %v1503
  %v1880 = vpack.c.b16 %v1508, %v1504
  %v1881 = vpack.c.b16 %v1509, %v1505
  %v1882 = vpack.c.b16 %v1514, %v1510
  %v1883 = vpack.c.b16 %v1515, %v1511
  %v1884 = vpack.c.b16 %v1516, %v1512
  %v1885 = vpack.c.b16 %v1517, %v1513
  %v1886 = vpack.c.b16 %v1522, %v1518
  %v1887 = vpack.c.b16 %v1523, %v1519
  %v1888 = vpack.c.b16 %v1524, %v1520
  %v1889 = vpack.c.b16 %v1525, %v1521
  %v1890 = vpack.c.b16 %v1530, %v1526
  %v1891 = vpack.c.b16 %v1531, %v1527
  %v1892 = vpack.c.b16 %v1532, %v1528
  %v1893 = vpack.c.b16 %v1533, %v1529
  %v1894 = vpack.c.b16 %v1538, %v1534
  %v1895 = vpack.c.b16 %v1539, %v1535
  %v1896 = vpack.c.b16 %v1540, %v1536
  %v1897 = vpack.c.b16 %v1541, %v1537
  %v1898 = vpack.c.b16 %v1546, %v1542
  %v1899 = vpack.c.b16 %v1547, %v1543
  %v1900 = vpack.c.b16 %v1548, %v1544
  %v1901 = vpack.c.b16 %v1549, %v1545
  %v1902 = vpack.c.b16 %v1554, %v1550
  %v1903 = vpack.c.b16 %v1555, %v1551
  %v1904 = vpack.c.b16 %v1556, %v1552
  %v1905 = vpack.c.b16 %v1557, %v1553
  %v1906 = vpack.c.b16 %v1562, %v1558
  %v1907 = vpack.c.b16 %v1563, %v1559
  %v1908 = vpack.c.b16 %v1564, %v1560
  %v1909 = vpack.c.b16 %v1565, %v1561
  %v1910 = vpack.c.b16 %v1570, %v1566
  %v1911 = vpack.c.b16 %v1571, %v1567
  %v1912 = vpack.c.b16 %v1572, %v1568
  %v1913 = vpack.c.b16 %v1573, %v1569
  %v1914 = vpack.c.b16 %v1578, %v1574
  %v1915 = vpack.c.b16 %v1579, %v1575
  %v1916 = vpack.c.b16 %v1580, %v1576
  %v1917 = vpack.c.b16 %v1581, %v1577
  %v1918 = vpack.c.b16 %v1586, %v1582
  %v1919 = vpack.c.b16 %v1587, %v1583
  %v1920 = vpack.c.b16 %v1588, %v1584
  %v1921 = vpack.c.b16 %v1589, %v1585
  %v1922 = vpack.c.b16 %v1594, %v1590
  %v1923 = vpack.c.b16 %v1595, %v1591
  %v1924 = vpack.c.b16 %v1596, %v1592
  %v1925 = vpack.c.b16 %v1597, %v1593
  %v1926 = vpack.c.b16 %v1602, %v1598
  %v1927 = vpack.c.b16 %v1603, %v1599
  %v1928 = vpack.c.b16 %v1604, %v1600
  %v1929 = vpack.c.b16 %v1605, %v1601
  %v1930 = vpack.c.b16 %v1610, %v1606
  %v1931 = vpack.c.b16 %v1611, %v1607
  %v1932 = vpack.c.b16 %v1612, %v1608
  %v1933 = vpack.c.b16 %v1613, %v1609
  %v1934 = vpack.c.b16 %v1618, %v1614
  %v1935 = vpack.c.b16 %v1619, %v1615
  %v1936 = vpack.c.b16 %v1620, %v1616
  %v1937 = vpack.c.b16 %v1621, %v1617
  %v1938 = vpack.c.b16 %v1626, %v1622
  %v1939 = vpack.c.b16 %v1627, %v1623
  %v1940 = vpack.c.b16 %v1628, %v1624
  %v1941 = vpack.c.b16 %v1629, %v1625
  %v1942 = vpack.c.b16 %v1634, %v1630
  %v1943 = vpack.c.b16 %v1635, %v1631
  %v1944 = vpack.c.b16 %v1636, %v1632
  %v1945 = vpack.c.b16 %v1637, %v1633
  %v1946 = vpack.c.b16 %v1642, %v1638
  %v1947 = vpack.c.b16 %v1643, %v1639
  %v1948 = vpack.c.b16 %v1644, %v1640
  %v1949 = vpack.c.b16 %v1645, %v1641
  %v1950 = vpack.c.b16 %v1650, %v1646
  %v1951 = vpack.c.b16 %v1651, %v1647
  %v1952 = vpack.c.b16 %v1652, %v1648
  %v1953 = vpack.c.b16 %v1653, %v1649
  %v1954 = vpack.c.b16 %v1658, %v1654
  %v1955 = vpack.c.b16 %v1659, %v1655
  %v1956 = vpack.c.b16 %v1660, %v1656
  %v1957 = vpack.c.b16 %v1661, %v1657
  %v1958 = vpack.c.b16 %v1666, %v1662
  %v1959 = vpack.c.b16 %v1667, %v1663
  %v1960 = vpack.c.b16 %v1668, %v1664
  %v1961 = vpack.c.b16 %v1669, %v1665
  %v1962 = vpack.c.b16 %v1674, %v1670
  %v1963 = vpack.c.b16 %v1675, %v1671
  %v1964 = vpack.c.b16 %v1676, %v1672
  %v1965 = vpack.c.b16 %v1677, %v1673
  %v1966 = vpack.c.b16 %v1682, %v1678
  %v1967 = vpack.c.b16 %v1683, %v1679
  %v1968 = vpack.c.b16 %v1684, %v1680
  %v1969 = vpack.c.b16 %v1685, %v1681
  %v1970 = vpack.c.b16 %v1690, %v1686
  %v1971 = vpack.c.b16 %v1691, %v1687
  %v1972 = vpack.c.b16 %v1692, %v1688
  %v1973 = vpack.c.b16 %v1693, %v1689
  %v1974 = vpack.c.b16 %v1698, %v1694
  %v1975 = vpack.c.b16 %v1699, %v1695
  %v1976 = vpack.c.b16 %v1700, %v1696
  %v1977 = vpack.c.b16 %v1701, %v1697
  %v1978 = vpack.c.b16 %v1706, %v1702
  %v1979 = vpack.c.b16 %v1707, %v1703
  %v1980 = vpack.c.b16 %v1708, %v1704
  %v1981 = vpack.c.b16 %v1709, %v1705
  %v1982 = vpack.c.b16 %v1714, %v1710
  %v1983 = vpack.c.b16 %v1715, %v1711
  %v1984 = vpack.c.b16 %v1716, %v1712
  %v1985 = vpack.c.b16 %v1717, %v1713
  %v1986 = vpack.c.b16 %v1722, %v1718
  %v1987 = vpack.c.b16 %v1723, %v1719
  %v1988 = vpack.c.b16 %v1724, %v1720
  %v1989 = vpack.c.b16 %v1725, %v1721
  %v1990 = vpack.c.b16 %v1730, %v1726
  %v1991 = vpack.c.b16 %v1731, %v1727
  %v1992 = vpack.c.b16 %v1732, %v1728
  %v1993 = vpack.c.b16 %v1733, %v1729
  %v1994 = vpack.c.b16 %v1738, %v1734
  %v1995 = vpack.c.b16 %v1739, %v1735
  %v1996 = vpack.c.b16 %v1740, %v1736
  %v1997 = vpack.c.b16 %v1741, %v1737
  %2254 = vmatpush.bf16.msra.mxu0 %v1770
  %2255 = vmatpush.bf16.msra.mxu0 %v1766
  %2256 = vmatpush.bf16.msra.mxu0 %v1762
  %2257 = vmatpush.bf16.msra.mxu0 %v1758
  %2258 = vmatpush.bf16.msra.mxu0 %v1754
  %2259 = vmatpush.bf16.msra.mxu0 %v1750
  %2260 = vmatpush.bf16.msra.mxu0 %v1746
  %2261 = vmatpush.bf16.msra.mxu0 %v1742
  %2262 = vmatmul.bf16.gmra.mxu0 %v692
  %v2263 = vpop.f32.mrf.mxu0
  %v2264 = vadd.f32 %v966, %v2263
  %v2265 = vpop.f32.mrf.mxu0
  %v2266 = vadd.f32 %v966, %v2265
  %2267 = vmatmul.bf16.gmra.mxu0 %v700
  %v2268 = vpop.f32.mrf.mxu0
  %v2269 = vadd.f32 %v966, %v2268
  %v2270 = vpop.f32.mrf.mxu0
  %v2271 = vadd.f32 %v966, %v2270
  %2272 = vdwg.mxu0
  %2273 = vmatpush.bf16.msra.mxu0 %v1802
  %2274 = vmatpush.bf16.msra.mxu0 %v1798
  %2275 = vmatpush.bf16.msra.mxu0 %v1794
  %2276 = vmatpush.bf16.msra.mxu0 %v1790
  %2277 = vmatpush.bf16.msra.mxu0 %v1786
  %2278 = vmatpush.bf16.msra.mxu0 %v1782
  %2279 = vmatpush.bf16.msra.mxu0 %v1778
  %2280 = vmatpush.bf16.msra.mxu0 %v1774
  %2281 = vmatmul.bf16.gmra.mxu0 %v693
  %v2282 = vpop.f32.mrf.mxu0
  %v2283 = vadd.f32 %v2264, %v2282
  %v2284 = vpop.f32.mrf.mxu0
  %v2285 = vadd.f32 %v2266, %v2284
  %2286 = vmatmul.bf16.gmra.mxu0 %v701
  %v2287 = vpop.f32.mrf.mxu0
  %v2288 = vadd.f32 %v2269, %v2287
  %v2289 = vpop.f32.mrf.mxu0
  %v2290 = vadd.f32 %v2271, %v2289
  %2291 = vdwg.mxu0
  %2292 = vmatpush.bf16.msra.mxu0 %v1834
  %2293 = vmatpush.bf16.msra.mxu0 %v1830
  %2294 = vmatpush.bf16.msra.mxu0 %v1826
  %2295 = vmatpush.bf16.msra.mxu0 %v1822
  %2296 = vmatpush.bf16.msra.mxu0 %v1818
  %2297 = vmatpush.bf16.msra.mxu0 %v1814
  %2298 = vmatpush.bf16.msra.mxu0 %v1810
  %2299 = vmatpush.bf16.msra.mxu0 %v1806
  %2300 = vmatmul.bf16.gmra.mxu0 %v694
  %v2301 = vpop.f32.mrf.mxu0
  %v2302 = vadd.f32 %v2283, %v2301
  %v2303 = vpop.f32.mrf.mxu0
  %v2304 = vadd.f32 %v2285, %v2303
  %2305 = vmatmul.bf16.gmra.mxu0 %v702
  %v2306 = vpop.f32.mrf.mxu0
  %v2307 = vadd.f32 %v2288, %v2306
  %v2308 = vpop.f32.mrf.mxu0
  %v2309 = vadd.f32 %v2290, %v2308
  %2310 = vdwg.mxu0
  %2311 = vmatpush.bf16.msra.mxu0 %v1866
  %2312 = vmatpush.bf16.msra.mxu0 %v1862
  %2313 = vmatpush.bf16.msra.mxu0 %v1858
  %2314 = vmatpush.bf16.msra.mxu0 %v1854
  %2315 = vmatpush.bf16.msra.mxu0 %v1850
  %2316 = vmatpush.bf16.msra.mxu0 %v1846
  %2317 = vmatpush.bf16.msra.mxu0 %v1842
  %2318 = vmatpush.bf16.msra.mxu0 %v1838
  %2319 = vmatmul.bf16.gmra.mxu0 %v695
  %v2320 = vpop.f32.mrf.mxu0
  %v2321 = vadd.f32 %v2302, %v2320
  %v2322 = vpop.f32.mrf.mxu0
  %v2323 = vadd.f32 %v2304, %v2322
  %2324 = vmatmul.bf16.gmra.mxu0 %v703
  %v2325 = vpop.f32.mrf.mxu0
  %v2326 = vadd.f32 %v2307, %v2325
  %v2327 = vpop.f32.mrf.mxu0
  %v2328 = vadd.f32 %v2309, %v2327
  %2329 = vdwg.mxu0
  %2330 = vmatpush.bf16.msra.mxu0 %v1898
  %2331 = vmatpush.bf16.msra.mxu0 %v1894
  %2332 = vmatpush.bf16.msra.mxu0 %v1890
  %2333 = vmatpush.bf16.msra.mxu0 %v1886
  %2334 = vmatpush.bf16.msra.mxu0 %v1882
  %2335 = vmatpush.bf16.msra.mxu0 %v1878
  %2336 = vmatpush.bf16.msra.mxu0 %v1874
  %2337 = vmatpush.bf16.msra.mxu0 %v1870
  %2338 = vmatmul.bf16.gmra.mxu0 %v696
  %v2339 = vpop.f32.mrf.mxu0
  %v2340 = vadd.f32 %v2321, %v2339
  %v2341 = vpop.f32.mrf.mxu0
  %v2342 = vadd.f32 %v2323, %v2341
  %2343 = vmatmul.bf16.gmra.mxu0 %v704
  %v2344 = vpop.f32.mrf.mxu0
  %v2345 = vadd.f32 %v2326, %v2344
  %v2346 = vpop.f32.mrf.mxu0
  %v2347 = vadd.f32 %v2328, %v2346
  %2348 = vdwg.mxu0
  %2349 = vmatpush.bf16.msra.mxu0 %v1930
  %2350 = vmatpush.bf16.msra.mxu0 %v1926
  %2351 = vmatpush.bf16.msra.mxu0 %v1922
  %2352 = vmatpush.bf16.msra.mxu0 %v1918
  %2353 = vmatpush.bf16.msra.mxu0 %v1914
  %2354 = vmatpush.bf16.msra.mxu0 %v1910
  %2355 = vmatpush.bf16.msra.mxu0 %v1906
  %2356 = vmatpush.bf16.msra.mxu0 %v1902
  %2357 = vmatmul.bf16.gmra.mxu0 %v697
  %v2358 = vpop.f32.mrf.mxu0
  %v2359 = vadd.f32 %v2340, %v2358
  %v2360 = vpop.f32.mrf.mxu0
  %v2361 = vadd.f32 %v2342, %v2360
  %2362 = vmatmul.bf16.gmra.mxu0 %v705
  %v2363 = vpop.f32.mrf.mxu0
  %v2364 = vadd.f32 %v2345, %v2363
  %v2365 = vpop.f32.mrf.mxu0
  %v2366 = vadd.f32 %v2347, %v2365
  %2367 = vdwg.mxu0
  %2368 = vmatpush.bf16.msra.mxu0 %v1962
  %2369 = vmatpush.bf16.msra.mxu0 %v1958
  %2370 = vmatpush.bf16.msra.mxu0 %v1954
  %2371 = vmatpush.bf16.msra.mxu0 %v1950
  %2372 = vmatpush.bf16.msra.mxu0 %v1946
  %2373 = vmatpush.bf16.msra.mxu0 %v1942
  %2374 = vmatpush.bf16.msra.mxu0 %v1938
  %2375 = vmatpush.bf16.msra.mxu0 %v1934
  %2376 = vmatmul.bf16.gmra.mxu0 %v698
  %v2377 = vpop.f32.mrf.mxu0
  %v2378 = vadd.f32 %v2359, %v2377
  %v2379 = vpop.f32.mrf.mxu0
  %v2380 = vadd.f32 %v2361, %v2379
  %2381 = vmatmul.bf16.gmra.mxu0 %v706
  %v2382 = vpop.f32.mrf.mxu0
  %v2383 = vadd.f32 %v2364, %v2382
  %v2384 = vpop.f32.mrf.mxu0
  %v2385 = vadd.f32 %v2366, %v2384
  %2386 = vdwg.mxu0
  %2387 = vmatpush.bf16.msra.mxu0 %v1994
  %2388 = vmatpush.bf16.msra.mxu0 %v1990
  %2389 = vmatpush.bf16.msra.mxu0 %v1986
  %2390 = vmatpush.bf16.msra.mxu0 %v1982
  %2391 = vmatpush.bf16.msra.mxu0 %v1978
  %2392 = vmatpush.bf16.msra.mxu0 %v1974
  %2393 = vmatpush.bf16.msra.mxu0 %v1970
  %2394 = vmatpush.bf16.msra.mxu0 %v1966
  %2395 = vmatmul.bf16.gmra.mxu0 %v699
  %v2396 = vpop.f32.mrf.mxu0
  %v2397 = vadd.f32 %v2378, %v2396
  %v2398 = vpop.f32.mrf.mxu0
  %v2399 = vadd.f32 %v2380, %v2398
  %2400 = vmatmul.bf16.gmra.mxu0 %v707
  %v2401 = vpop.f32.mrf.mxu0
  %v2402 = vadd.f32 %v2383, %v2401
  %v2403 = vpop.f32.mrf.mxu0
  %v2404 = vadd.f32 %v2385, %v2403
  %2405 = vdwg.mxu0
  %2406 = vmatpush.bf16.msra.mxu0 %v1771
  %2407 = vmatpush.bf16.msra.mxu0 %v1767
  %2408 = vmatpush.bf16.msra.mxu0 %v1763
  %2409 = vmatpush.bf16.msra.mxu0 %v1759
  %2410 = vmatpush.bf16.msra.mxu0 %v1755
  %2411 = vmatpush.bf16.msra.mxu0 %v1751
  %2412 = vmatpush.bf16.msra.mxu0 %v1747
  %2413 = vmatpush.bf16.msra.mxu0 %v1743
  %2414 = vmatmul.bf16.gmra.mxu0 %v692
  %v2415 = vpop.f32.mrf.mxu0
  %v2416 = vadd.f32 %v967, %v2415
  %v2417 = vpop.f32.mrf.mxu0
  %v2418 = vadd.f32 %v967, %v2417
  %2419 = vmatmul.bf16.gmra.mxu0 %v700
  %v2420 = vpop.f32.mrf.mxu0
  %v2421 = vadd.f32 %v967, %v2420
  %v2422 = vpop.f32.mrf.mxu0
  %v2423 = vadd.f32 %v967, %v2422
  %2424 = vdwg.mxu0
  %2425 = vmatpush.bf16.msra.mxu0 %v1803
  %2426 = vmatpush.bf16.msra.mxu0 %v1799
  %2427 = vmatpush.bf16.msra.mxu0 %v1795
  %2428 = vmatpush.bf16.msra.mxu0 %v1791
  %2429 = vmatpush.bf16.msra.mxu0 %v1787
  %2430 = vmatpush.bf16.msra.mxu0 %v1783
  %2431 = vmatpush.bf16.msra.mxu0 %v1779
  %2432 = vmatpush.bf16.msra.mxu0 %v1775
  %2433 = vmatmul.bf16.gmra.mxu0 %v693
  %v2434 = vpop.f32.mrf.mxu0
  %v2435 = vadd.f32 %v2416, %v2434
  %v2436 = vpop.f32.mrf.mxu0
  %v2437 = vadd.f32 %v2418, %v2436
  %2438 = vmatmul.bf16.gmra.mxu0 %v701
  %v2439 = vpop.f32.mrf.mxu0
  %v2440 = vadd.f32 %v2421, %v2439
  %v2441 = vpop.f32.mrf.mxu0
  %v2442 = vadd.f32 %v2423, %v2441
  %2443 = vdwg.mxu0
  %2444 = vmatpush.bf16.msra.mxu0 %v1835
  %2445 = vmatpush.bf16.msra.mxu0 %v1831
  %2446 = vmatpush.bf16.msra.mxu0 %v1827
  %2447 = vmatpush.bf16.msra.mxu0 %v1823
  %2448 = vmatpush.bf16.msra.mxu0 %v1819
  %2449 = vmatpush.bf16.msra.mxu0 %v1815
  %2450 = vmatpush.bf16.msra.mxu0 %v1811
  %2451 = vmatpush.bf16.msra.mxu0 %v1807
  %2452 = vmatmul.bf16.gmra.mxu0 %v694
  %v2453 = vpop.f32.mrf.mxu0
  %v2454 = vadd.f32 %v2435, %v2453
  %v2455 = vpop.f32.mrf.mxu0
  %v2456 = vadd.f32 %v2437, %v2455
  %2457 = vmatmul.bf16.gmra.mxu0 %v702
  %v2458 = vpop.f32.mrf.mxu0
  %v2459 = vadd.f32 %v2440, %v2458
  %v2460 = vpop.f32.mrf.mxu0
  %v2461 = vadd.f32 %v2442, %v2460
  %2462 = vdwg.mxu0
  %2463 = vmatpush.bf16.msra.mxu0 %v1867
  %2464 = vmatpush.bf16.msra.mxu0 %v1863
  %2465 = vmatpush.bf16.msra.mxu0 %v1859
  %2466 = vmatpush.bf16.msra.mxu0 %v1855
  %2467 = vmatpush.bf16.msra.mxu0 %v1851
  %2468 = vmatpush.bf16.msra.mxu0 %v1847
  %2469 = vmatpush.bf16.msra.mxu0 %v1843
  %2470 = vmatpush.bf16.msra.mxu0 %v1839
  %2471 = vmatmul.bf16.gmra.mxu0 %v695
  %v2472 = vpop.f32.mrf.mxu0
  %v2473 = vadd.f32 %v2454, %v2472
  %v2474 = vpop.f32.mrf.mxu0
  %v2475 = vadd.f32 %v2456, %v2474
  %2476 = vmatmul.bf16.gmra.mxu0 %v703
  %v2477 = vpop.f32.mrf.mxu0
  %v2478 = vadd.f32 %v2459, %v2477
  %v2479 = vpop.f32.mrf.mxu0
  %v2480 = vadd.f32 %v2461, %v2479
  %2481 = vdwg.mxu0
  %2482 = vmatpush.bf16.msra.mxu0 %v1899
  %2483 = vmatpush.bf16.msra.mxu0 %v1895
  %2484 = vmatpush.bf16.msra.mxu0 %v1891
  %2485 = vmatpush.bf16.msra.mxu0 %v1887
  %2486 = vmatpush.bf16.msra.mxu0 %v1883
  %2487 = vmatpush.bf16.msra.mxu0 %v1879
  %2488 = vmatpush.bf16.msra.mxu0 %v1875
  %2489 = vmatpush.bf16.msra.mxu0 %v1871
  %2490 = vmatmul.bf16.gmra.mxu0 %v696
  %v2491 = vpop.f32.mrf.mxu0
  %v2492 = vadd.f32 %v2473, %v2491
  %v2493 = vpop.f32.mrf.mxu0
  %v2494 = vadd.f32 %v2475, %v2493
  %2495 = vmatmul.bf16.gmra.mxu0 %v704
  %v2496 = vpop.f32.mrf.mxu0
  %v2497 = vadd.f32 %v2478, %v2496
  %v2498 = vpop.f32.mrf.mxu0
  %v2499 = vadd.f32 %v2480, %v2498
  %2500 = vdwg.mxu0
  %2501 = vmatpush.bf16.msra.mxu0 %v1931
  %2502 = vmatpush.bf16.msra.mxu0 %v1927
  %2503 = vmatpush.bf16.msra.mxu0 %v1923
  %2504 = vmatpush.bf16.msra.mxu0 %v1919
  %2505 = vmatpush.bf16.msra.mxu0 %v1915
  %2506 = vmatpush.bf16.msra.mxu0 %v1911
  %2507 = vmatpush.bf16.msra.mxu0 %v1907
  %2508 = vmatpush.bf16.msra.mxu0 %v1903
  %2509 = vmatmul.bf16.gmra.mxu0 %v697
  %v2510 = vpop.f32.mrf.mxu0
  %v2511 = vadd.f32 %v2492, %v2510
  %v2512 = vpop.f32.mrf.mxu0
  %v2513 = vadd.f32 %v2494, %v2512
  %2514 = vmatmul.bf16.gmra.mxu0 %v705
  %v2515 = vpop.f32.mrf.mxu0
  %v2516 = vadd.f32 %v2497, %v2515
  %v2517 = vpop.f32.mrf.mxu0
  %v2518 = vadd.f32 %v2499, %v2517
  %2519 = vdwg.mxu0
  %2520 = vmatpush.bf16.msra.mxu0 %v1963
  %2521 = vmatpush.bf16.msra.mxu0 %v1959
  %2522 = vmatpush.bf16.msra.mxu0 %v1955
  %2523 = vmatpush.bf16.msra.mxu0 %v1951
  %2524 = vmatpush.bf16.msra.mxu0 %v1947
  %2525 = vmatpush.bf16.msra.mxu0 %v1943
  %2526 = vmatpush.bf16.msra.mxu0 %v1939
  %2527 = vmatpush.bf16.msra.mxu0 %v1935
  %2528 = vmatmul.bf16.gmra.mxu0 %v698
  %v2529 = vpop.f32.mrf.mxu0
  %v2530 = vadd.f32 %v2511, %v2529
  %v2531 = vpop.f32.mrf.mxu0
  %v2532 = vadd.f32 %v2513, %v2531
  %2533 = vmatmul.bf16.gmra.mxu0 %v706
  %v2534 = vpop.f32.mrf.mxu0
  %v2535 = vadd.f32 %v2516, %v2534
  %v2536 = vpop.f32.mrf.mxu0
  %v2537 = vadd.f32 %v2518, %v2536
  %2538 = vdwg.mxu0
  %2539 = vmatpush.bf16.msra.mxu0 %v1995
  %2540 = vmatpush.bf16.msra.mxu0 %v1991
  %2541 = vmatpush.bf16.msra.mxu0 %v1987
  %2542 = vmatpush.bf16.msra.mxu0 %v1983
  %2543 = vmatpush.bf16.msra.mxu0 %v1979
  %2544 = vmatpush.bf16.msra.mxu0 %v1975
  %2545 = vmatpush.bf16.msra.mxu0 %v1971
  %2546 = vmatpush.bf16.msra.mxu0 %v1967
  %2547 = vmatmul.bf16.gmra.mxu0 %v699
  %v2548 = vpop.f32.mrf.mxu0
  %v2549 = vadd.f32 %v2530, %v2548
  %v2550 = vpop.f32.mrf.mxu0
  %v2551 = vadd.f32 %v2532, %v2550
  %2552 = vmatmul.bf16.gmra.mxu0 %v707
  %v2553 = vpop.f32.mrf.mxu0
  %v2554 = vadd.f32 %v2535, %v2553
  %v2555 = vpop.f32.mrf.mxu0
  %v2556 = vadd.f32 %v2537, %v2555
  %2557 = vdwg.mxu0
  %2558 = vmatpush.bf16.msra.mxu0 %v1772
  %2559 = vmatpush.bf16.msra.mxu0 %v1768
  %2560 = vmatpush.bf16.msra.mxu0 %v1764
  %2561 = vmatpush.bf16.msra.mxu0 %v1760
  %2562 = vmatpush.bf16.msra.mxu0 %v1756
  %2563 = vmatpush.bf16.msra.mxu0 %v1752
  %2564 = vmatpush.bf16.msra.mxu0 %v1748
  %2565 = vmatpush.bf16.msra.mxu0 %v1744
  %2566 = vmatmul.bf16.gmra.mxu0 %v692
  %v2567 = vpop.f32.mrf.mxu0
  %v2568 = vadd.f32 %v968, %v2567
  %v2569 = vpop.f32.mrf.mxu0
  %v2570 = vadd.f32 %v968, %v2569
  %2571 = vmatmul.bf16.gmra.mxu0 %v700
  %v2572 = vpop.f32.mrf.mxu0
  %v2573 = vadd.f32 %v968, %v2572
  %v2574 = vpop.f32.mrf.mxu0
  %v2575 = vadd.f32 %v968, %v2574
  %2576 = vdwg.mxu0
  %2577 = vmatpush.bf16.msra.mxu0 %v1804
  %2578 = vmatpush.bf16.msra.mxu0 %v1800
  %2579 = vmatpush.bf16.msra.mxu0 %v1796
  %2580 = vmatpush.bf16.msra.mxu0 %v1792
  %2581 = vmatpush.bf16.msra.mxu0 %v1788
  %2582 = vmatpush.bf16.msra.mxu0 %v1784
  %2583 = vmatpush.bf16.msra.mxu0 %v1780
  %2584 = vmatpush.bf16.msra.mxu0 %v1776
  %2585 = vmatmul.bf16.gmra.mxu0 %v693
  %v2586 = vpop.f32.mrf.mxu0
  %v2587 = vadd.f32 %v2568, %v2586
  %v2588 = vpop.f32.mrf.mxu0
  %v2589 = vadd.f32 %v2570, %v2588
  %2590 = vmatmul.bf16.gmra.mxu0 %v701
  %v2591 = vpop.f32.mrf.mxu0
  %v2592 = vadd.f32 %v2573, %v2591
  %v2593 = vpop.f32.mrf.mxu0
  %v2594 = vadd.f32 %v2575, %v2593
  %2595 = vdwg.mxu0
  %2596 = vmatpush.bf16.msra.mxu0 %v1836
  %2597 = vmatpush.bf16.msra.mxu0 %v1832
  %2598 = vmatpush.bf16.msra.mxu0 %v1828
  %2599 = vmatpush.bf16.msra.mxu0 %v1824
  %2600 = vmatpush.bf16.msra.mxu0 %v1820
  %2601 = vmatpush.bf16.msra.mxu0 %v1816
  %2602 = vmatpush.bf16.msra.mxu0 %v1812
  %2603 = vmatpush.bf16.msra.mxu0 %v1808
  %2604 = vmatmul.bf16.gmra.mxu0 %v694
  %v2605 = vpop.f32.mrf.mxu0
  %v2606 = vadd.f32 %v2587, %v2605
  %v2607 = vpop.f32.mrf.mxu0
  %v2608 = vadd.f32 %v2589, %v2607
  %2609 = vmatmul.bf16.gmra.mxu0 %v702
  %v2610 = vpop.f32.mrf.mxu0
  %v2611 = vadd.f32 %v2592, %v2610
  %v2612 = vpop.f32.mrf.mxu0
  %v2613 = vadd.f32 %v2594, %v2612
  %2614 = vdwg.mxu0
  %2615 = vmatpush.bf16.msra.mxu0 %v1868
  %2616 = vmatpush.bf16.msra.mxu0 %v1864
  %2617 = vmatpush.bf16.msra.mxu0 %v1860
  %2618 = vmatpush.bf16.msra.mxu0 %v1856
  %2619 = vmatpush.bf16.msra.mxu0 %v1852
  %2620 = vmatpush.bf16.msra.mxu0 %v1848
  %2621 = vmatpush.bf16.msra.mxu0 %v1844
  %2622 = vmatpush.bf16.msra.mxu0 %v1840
  %2623 = vmatmul.bf16.gmra.mxu0 %v695
  %v2624 = vpop.f32.mrf.mxu0
  %v2625 = vadd.f32 %v2606, %v2624
  %v2626 = vpop.f32.mrf.mxu0
  %v2627 = vadd.f32 %v2608, %v2626
  %2628 = vmatmul.bf16.gmra.mxu0 %v703
  %v2629 = vpop.f32.mrf.mxu0
  %v2630 = vadd.f32 %v2611, %v2629
  %v2631 = vpop.f32.mrf.mxu0
  %v2632 = vadd.f32 %v2613, %v2631
  %2633 = vdwg.mxu0
  %2634 = vmatpush.bf16.msra.mxu0 %v1900
  %2635 = vmatpush.bf16.msra.mxu0 %v1896
  %2636 = vmatpush.bf16.msra.mxu0 %v1892
  %2637 = vmatpush.bf16.msra.mxu0 %v1888
  %2638 = vmatpush.bf16.msra.mxu0 %v1884
  %2639 = vmatpush.bf16.msra.mxu0 %v1880
  %2640 = vmatpush.bf16.msra.mxu0 %v1876
  %2641 = vmatpush.bf16.msra.mxu0 %v1872
  %2642 = vmatmul.bf16.gmra.mxu0 %v696
  %v2643 = vpop.f32.mrf.mxu0
  %v2644 = vadd.f32 %v2625, %v2643
  %v2645 = vpop.f32.mrf.mxu0
  %v2646 = vadd.f32 %v2627, %v2645
  %2647 = vmatmul.bf16.gmra.mxu0 %v704
  %v2648 = vpop.f32.mrf.mxu0
  %v2649 = vadd.f32 %v2630, %v2648
  %v2650 = vpop.f32.mrf.mxu0
  %v2651 = vadd.f32 %v2632, %v2650
  %2652 = vdwg.mxu0
  %2653 = vmatpush.bf16.msra.mxu0 %v1932
  %2654 = vmatpush.bf16.msra.mxu0 %v1928
  %2655 = vmatpush.bf16.msra.mxu0 %v1924
  %2656 = vmatpush.bf16.msra.mxu0 %v1920
  %2657 = vmatpush.bf16.msra.mxu0 %v1916
  %2658 = vmatpush.bf16.msra.mxu0 %v1912
  %2659 = vmatpush.bf16.msra.mxu0 %v1908
  %2660 = vmatpush.bf16.msra.mxu0 %v1904
  %2661 = vmatmul.bf16.gmra.mxu0 %v697
  %v2662 = vpop.f32.mrf.mxu0
  %v2663 = vadd.f32 %v2644, %v2662
  %v2664 = vpop.f32.mrf.mxu0
  %v2665 = vadd.f32 %v2646, %v2664
  %2666 = vmatmul.bf16.gmra.mxu0 %v705
  %v2667 = vpop.f32.mrf.mxu0
  %v2668 = vadd.f32 %v2649, %v2667
  %v2669 = vpop.f32.mrf.mxu0
  %v2670 = vadd.f32 %v2651, %v2669
  %2671 = vdwg.mxu0
  %2672 = vmatpush.bf16.msra.mxu0 %v1964
  %2673 = vmatpush.bf16.msra.mxu0 %v1960
  %2674 = vmatpush.bf16.msra.mxu0 %v1956
  %2675 = vmatpush.bf16.msra.mxu0 %v1952
  %2676 = vmatpush.bf16.msra.mxu0 %v1948
  %2677 = vmatpush.bf16.msra.mxu0 %v1944
  %2678 = vmatpush.bf16.msra.mxu0 %v1940
  %2679 = vmatpush.bf16.msra.mxu0 %v1936
  %2680 = vmatmul.bf16.gmra.mxu0 %v698
  %v2681 = vpop.f32.mrf.mxu0
  %v2682 = vadd.f32 %v2663, %v2681
  %v2683 = vpop.f32.mrf.mxu0
  %v2684 = vadd.f32 %v2665, %v2683
  %2685 = vmatmul.bf16.gmra.mxu0 %v706
  %v2686 = vpop.f32.mrf.mxu0
  %v2687 = vadd.f32 %v2668, %v2686
  %v2688 = vpop.f32.mrf.mxu0
  %v2689 = vadd.f32 %v2670, %v2688
  %2690 = vdwg.mxu0
  %2691 = vmatpush.bf16.msra.mxu0 %v1996
  %2692 = vmatpush.bf16.msra.mxu0 %v1992
  %2693 = vmatpush.bf16.msra.mxu0 %v1988
  %2694 = vmatpush.bf16.msra.mxu0 %v1984
  %2695 = vmatpush.bf16.msra.mxu0 %v1980
  %2696 = vmatpush.bf16.msra.mxu0 %v1976
  %2697 = vmatpush.bf16.msra.mxu0 %v1972
  %2698 = vmatpush.bf16.msra.mxu0 %v1968
  %2699 = vmatmul.bf16.gmra.mxu0 %v699
  %v2700 = vpop.f32.mrf.mxu0
  %v2701 = vadd.f32 %v2682, %v2700
  %v2702 = vpop.f32.mrf.mxu0
  %v2703 = vadd.f32 %v2684, %v2702
  %2704 = vmatmul.bf16.gmra.mxu0 %v707
  %v2705 = vpop.f32.mrf.mxu0
  %v2706 = vadd.f32 %v2687, %v2705
  %v2707 = vpop.f32.mrf.mxu0
  %v2708 = vadd.f32 %v2689, %v2707
  %2709 = vdwg.mxu0
  %2710 = vmatpush.bf16.msra.mxu0 %v1773
  %2711 = vmatpush.bf16.msra.mxu0 %v1769
  %2712 = vmatpush.bf16.msra.mxu0 %v1765
  %2713 = vmatpush.bf16.msra.mxu0 %v1761
  %2714 = vmatpush.bf16.msra.mxu0 %v1757
  %2715 = vmatpush.bf16.msra.mxu0 %v1753
  %2716 = vmatpush.bf16.msra.mxu0 %v1749
  %2717 = vmatpush.bf16.msra.mxu0 %v1745
  %2718 = vmatmul.bf16.gmra.mxu0 %v692
  %v2719 = vpop.f32.mrf.mxu0
  %v2720 = vadd.f32 %v969, %v2719
  %v2721 = vpop.f32.mrf.mxu0
  %v2722 = vadd.f32 %v969, %v2721
  %2723 = vmatmul.bf16.gmra.mxu0 %v700
  %v2724 = vpop.f32.mrf.mxu0
  %v2725 = vadd.f32 %v969, %v2724
  %v2726 = vpop.f32.mrf.mxu0
  %v2727 = vadd.f32 %v969, %v2726
  %2728 = vdwg.mxu0
  %2729 = vmatpush.bf16.msra.mxu0 %v1805
  %2730 = vmatpush.bf16.msra.mxu0 %v1801
  %2731 = vmatpush.bf16.msra.mxu0 %v1797
  %2732 = vmatpush.bf16.msra.mxu0 %v1793
  %2733 = vmatpush.bf16.msra.mxu0 %v1789
  %2734 = vmatpush.bf16.msra.mxu0 %v1785
  %2735 = vmatpush.bf16.msra.mxu0 %v1781
  %2736 = vmatpush.bf16.msra.mxu0 %v1777
  %2737 = vmatmul.bf16.gmra.mxu0 %v693
  %v2738 = vpop.f32.mrf.mxu0
  %v2739 = vadd.f32 %v2720, %v2738
  %v2740 = vpop.f32.mrf.mxu0
  %v2741 = vadd.f32 %v2722, %v2740
  %2742 = vmatmul.bf16.gmra.mxu0 %v701
  %v2743 = vpop.f32.mrf.mxu0
  %v2744 = vadd.f32 %v2725, %v2743
  %v2745 = vpop.f32.mrf.mxu0
  %v2746 = vadd.f32 %v2727, %v2745
  %2747 = vdwg.mxu0
  %2748 = vmatpush.bf16.msra.mxu0 %v1837
  %2749 = vmatpush.bf16.msra.mxu0 %v1833
  %2750 = vmatpush.bf16.msra.mxu0 %v1829
  %2751 = vmatpush.bf16.msra.mxu0 %v1825
  %2752 = vmatpush.bf16.msra.mxu0 %v1821
  %2753 = vmatpush.bf16.msra.mxu0 %v1817
  %2754 = vmatpush.bf16.msra.mxu0 %v1813
  %2755 = vmatpush.bf16.msra.mxu0 %v1809
  %2756 = vmatmul.bf16.gmra.mxu0 %v694
  %v2757 = vpop.f32.mrf.mxu0
  %v2758 = vadd.f32 %v2739, %v2757
  %v2759 = vpop.f32.mrf.mxu0
  %v2760 = vadd.f32 %v2741, %v2759
  %2761 = vmatmul.bf16.gmra.mxu0 %v702
  %v2762 = vpop.f32.mrf.mxu0
  %v2763 = vadd.f32 %v2744, %v2762
  %v2764 = vpop.f32.mrf.mxu0
  %v2765 = vadd.f32 %v2746, %v2764
  %2766 = vdwg.mxu0
  %2767 = vmatpush.bf16.msra.mxu0 %v1869
  %2768 = vmatpush.bf16.msra.mxu0 %v1865
  %2769 = vmatpush.bf16.msra.mxu0 %v1861
  %2770 = vmatpush.bf16.msra.mxu0 %v1857
  %2771 = vmatpush.bf16.msra.mxu0 %v1853
  %2772 = vmatpush.bf16.msra.mxu0 %v1849
  %2773 = vmatpush.bf16.msra.mxu0 %v1845
  %2774 = vmatpush.bf16.msra.mxu0 %v1841
  %2775 = vmatmul.bf16.gmra.mxu0 %v695
  %v2776 = vpop.f32.mrf.mxu0
  %v2777 = vadd.f32 %v2758, %v2776
  %v2778 = vpop.f32.mrf.mxu0
  %v2779 = vadd.f32 %v2760, %v2778
  %2780 = vmatmul.bf16.gmra.mxu0 %v703
  %v2781 = vpop.f32.mrf.mxu0
  %v2782 = vadd.f32 %v2763, %v2781
  %v2783 = vpop.f32.mrf.mxu0
  %v2784 = vadd.f32 %v2765, %v2783
  %2785 = vdwg.mxu0
  %2786 = vmatpush.bf16.msra.mxu0 %v1901
  %2787 = vmatpush.bf16.msra.mxu0 %v1897
  %2788 = vmatpush.bf16.msra.mxu0 %v1893
  %2789 = vmatpush.bf16.msra.mxu0 %v1889
  %2790 = vmatpush.bf16.msra.mxu0 %v1885
  %2791 = vmatpush.bf16.msra.mxu0 %v1881
  %2792 = vmatpush.bf16.msra.mxu0 %v1877
  %2793 = vmatpush.bf16.msra.mxu0 %v1873
  %2794 = vmatmul.bf16.gmra.mxu0 %v696
  %v2795 = vpop.f32.mrf.mxu0
  %v2796 = vadd.f32 %v2777, %v2795
  %v2797 = vpop.f32.mrf.mxu0
  %v2798 = vadd.f32 %v2779, %v2797
  %2799 = vmatmul.bf16.gmra.mxu0 %v704
  %v2800 = vpop.f32.mrf.mxu0
  %v2801 = vadd.f32 %v2782, %v2800
  %v2802 = vpop.f32.mrf.mxu0
  %v2803 = vadd.f32 %v2784, %v2802
  %2804 = vdwg.mxu0
  %2805 = vmatpush.bf16.msra.mxu0 %v1933
  %2806 = vmatpush.bf16.msra.mxu0 %v1929
  %2807 = vmatpush.bf16.msra.mxu0 %v1925
  %2808 = vmatpush.bf16.msra.mxu0 %v1921
  %2809 = vmatpush.bf16.msra.mxu0 %v1917
  %2810 = vmatpush.bf16.msra.mxu0 %v1913
  %2811 = vmatpush.bf16.msra.mxu0 %v1909
  %2812 = vmatpush.bf16.msra.mxu0 %v1905
  %2813 = vmatmul.bf16.gmra.mxu0 %v697
  %v2814 = vpop.f32.mrf.mxu0
  %v2815 = vadd.f32 %v2796, %v2814
  %v2816 = vpop.f32.mrf.mxu0
  %v2817 = vadd.f32 %v2798, %v2816
  %2818 = vmatmul.bf16.gmra.mxu0 %v705
  %v2819 = vpop.f32.mrf.mxu0
  %v2820 = vadd.f32 %v2801, %v2819
  %v2821 = vpop.f32.mrf.mxu0
  %v2822 = vadd.f32 %v2803, %v2821
  %2823 = vdwg.mxu0
  %2824 = vmatpush.bf16.msra.mxu0 %v1965
  %2825 = vmatpush.bf16.msra.mxu0 %v1961
  %2826 = vmatpush.bf16.msra.mxu0 %v1957
  %2827 = vmatpush.bf16.msra.mxu0 %v1953
  %2828 = vmatpush.bf16.msra.mxu0 %v1949
  %2829 = vmatpush.bf16.msra.mxu0 %v1945
  %2830 = vmatpush.bf16.msra.mxu0 %v1941
  %2831 = vmatpush.bf16.msra.mxu0 %v1937
  %2832 = vmatmul.bf16.gmra.mxu0 %v698
  %v2833 = vpop.f32.mrf.mxu0
  %v2834 = vadd.f32 %v2815, %v2833
  %v2835 = vpop.f32.mrf.mxu0
  %v2836 = vadd.f32 %v2817, %v2835
  %2837 = vmatmul.bf16.gmra.mxu0 %v706
  %v2838 = vpop.f32.mrf.mxu0
  %v2839 = vadd.f32 %v2820, %v2838
  %v2840 = vpop.f32.mrf.mxu0
  %v2841 = vadd.f32 %v2822, %v2840
  %2842 = vdwg.mxu0
  %2843 = vmatpush.bf16.msra.mxu0 %v1997
  %2844 = vmatpush.bf16.msra.mxu0 %v1993
  %2845 = vmatpush.bf16.msra.mxu0 %v1989
  %2846 = vmatpush.bf16.msra.mxu0 %v1985
  %2847 = vmatpush.bf16.msra.mxu0 %v1981
  %2848 = vmatpush.bf16.msra.mxu0 %v1977
  %2849 = vmatpush.bf16.msra.mxu0 %v1973
  %2850 = vmatpush.bf16.msra.mxu0 %v1969
  %2851 = vmatmul.bf16.gmra.mxu0 %v699
  %v2852 = vpop.f32.mrf.mxu0
  %v2853 = vadd.f32 %v2834, %v2852
  %v2854 = vpop.f32.mrf.mxu0
  %v2855 = vadd.f32 %v2836, %v2854
  %2856 = vmatmul.bf16.gmra.mxu0 %v707
  %v2857 = vpop.f32.mrf.mxu0
  %v2858 = vadd.f32 %v2839, %v2857
  %v2859 = vpop.f32.mrf.mxu0
  %v2860 = vadd.f32 %v2841, %v2859
  %2861 = vdwg.mxu0
  %vm2862 = vcmp.gt.f32.partialorder %v2397, 0.0
  %vm2863 = vcmp.gt.f32.partialorder %v2549, 0.0
  %vm2864 = vcmp.gt.f32.partialorder %v2701, 0.0
  %vm2865 = vcmp.gt.f32.partialorder %v2853, 0.0
  %vm2866 = vcmp.gt.f32.partialorder %v2399, 0.0
  %vm2867 = vcmp.gt.f32.partialorder %v2551, 0.0
  %vm2868 = vcmp.gt.f32.partialorder %v2703, 0.0
  %vm2869 = vcmp.gt.f32.partialorder %v2855, 0.0
  %vm2870 = vcmp.gt.f32.partialorder %v2402, 0.0
  %vm2871 = vcmp.gt.f32.partialorder %v2554, 0.0
  %vm2872 = vcmp.gt.f32.partialorder %v2706, 0.0
  %vm2873 = vcmp.gt.f32.partialorder %v2858, 0.0
  %vm2874 = vcmp.gt.f32.partialorder %v2404, 0.0
  %vm2875 = vcmp.gt.f32.partialorder %v2556, 0.0
  %vm2876 = vcmp.gt.f32.partialorder %v2708, 0.0
  %vm2877 = vcmp.gt.f32.partialorder %v2860, 0.0
  %v2878 = vmul.f32 %v2397, 0.01
  %v2879 = vmul.f32 %v2549, 0.01
  %v2880 = vmul.f32 %v2701, 0.01
  %v2881 = vmul.f32 %v2853, 0.01
  %v2882 = vmul.f32 %v2399, 0.01
  %v2883 = vmul.f32 %v2551, 0.01
  %v2884 = vmul.f32 %v2703, 0.01
  %v2885 = vmul.f32 %v2855, 0.01
  %v2886 = vmul.f32 %v2402, 0.01
  %v2887 = vmul.f32 %v2554, 0.01
  %v2888 = vmul.f32 %v2706, 0.01
  %v2889 = vmul.f32 %v2858, 0.01
  %v2890 = vmul.f32 %v2404, 0.01
  %v2891 = vmul.f32 %v2556, 0.01
  %v2892 = vmul.f32 %v2708, 0.01
  %v2893 = vmul.f32 %v2860, 0.01
  %v2894 = vsel %vm2862, %v2397, %v2878
  %v2895 = vsel %vm2863, %v2549, %v2879
  %v2896 = vsel %vm2864, %v2701, %v2880
  %v2897 = vsel %vm2865, %v2853, %v2881
  %v2898 = vsel %vm2866, %v2399, %v2882
  %v2899 = vsel %vm2867, %v2551, %v2883
  %v2900 = vsel %vm2868, %v2703, %v2884
  %v2901 = vsel %vm2869, %v2855, %v2885
  %v2902 = vsel %vm2870, %v2402, %v2886
  %v2903 = vsel %vm2871, %v2554, %v2887
  %v2904 = vsel %vm2872, %v2706, %v2888
  %v2905 = vsel %vm2873, %v2858, %v2889
  %v2906 = vsel %vm2874, %v2404, %v2890
  %v2907 = vsel %vm2875, %v2556, %v2891
  %v2908 = vsel %vm2876, %v2708, %v2892
  %v2909 = vsel %vm2877, %v2860, %v2893
  %v2910 = vpack.c.bf16 %v2898, %v2894
  %v2911 = vpack.c.bf16 %v2899, %v2895
  %v2912 = vpack.c.bf16 %v2900, %v2896
  %v2913 = vpack.c.bf16 %v2901, %v2897
  %v2914 = vpack.c.bf16 %v2906, %v2902
  %v2915 = vpack.c.bf16 %v2907, %v2903
  %v2916 = vpack.c.bf16 %v2908, %v2904
  %v2917 = vpack.c.bf16 %v2909, %v2905
  %v2918 = vld [vmem:[%s5] sm:$0xf]
  %v2919 = vld [vmem:[%s5 + $0x4] sm:$0xf]
  %v2920 = vld [vmem:[%s5 + $0x8] sm:$0xf]
  %v2921 = vld [vmem:[%s5 + $0xc] sm:$0xf]
  %v2922 = vld [vmem:[%s5 + $0x10] sm:$0xf]
  %v2923 = vld [vmem:[%s5 + $0x14] sm:$0xf]
  %v2924 = vld [vmem:[%s5 + $0x18] sm:$0xf]
  %v2925 = vld [vmem:[%s5 + $0x1c] sm:$0xf]
  %v2926 = vld [vmem:[%s5 + $0x20] sm:$0xf]
  %v2927 = vld [vmem:[%s5 + $0x24] sm:$0xf]
  %v2928 = vld [vmem:[%s5 + $0x28] sm:$0xf]
  %v2929 = vld [vmem:[%s5 + $0x2c] sm:$0xf]
  %v2930 = vld [vmem:[%s5 + $0x30] sm:$0xf]
  %v2931 = vld [vmem:[%s5 + $0x34] sm:$0xf]
  %v2932 = vld [vmem:[%s5 + $0x38] sm:$0xf]
  %v2933 = vld [vmem:[%s5 + $0x3c] sm:$0xf]
  %v2934 = vld [vmem:[%s5 + $0x40] sm:$0xf]
  %v2935 = vld [vmem:[%s5 + $0x44] sm:$0xf]
  %v2936 = vld [vmem:[%s5 + $0x48] sm:$0xf]
  %v2937 = vld [vmem:[%s5 + $0x4c] sm:$0xf]
  %v2938 = vld [vmem:[%s5 + $0x50] sm:$0xf]
  %v2939 = vld [vmem:[%s5 + $0x54] sm:$0xf]
  %v2940 = vld [vmem:[%s5 + $0x58] sm:$0xf]
  %v2941 = vld [vmem:[%s5 + $0x5c] sm:$0xf]
  %v2942 = vld [vmem:[%s5 + $0x60] sm:$0xf]
  %v2943 = vld [vmem:[%s5 + $0x64] sm:$0xf]
  %v2944 = vld [vmem:[%s5 + $0x68] sm:$0xf]
  %v2945 = vld [vmem:[%s5 + $0x6c] sm:$0xf]
  %v2946 = vld [vmem:[%s5 + $0x70] sm:$0xf]
  %v2947 = vld [vmem:[%s5 + $0x74] sm:$0xf]
  %v2948 = vld [vmem:[%s5 + $0x78] sm:$0xf]
  %v2949 = vld [vmem:[%s5 + $0x7c] sm:$0xf]
  %v2950 = vld [vmem:[%s5 + $0x80] sm:$0xf]
  %v2951 = vld [vmem:[%s5 + $0x84] sm:$0xf]
  %v2952 = vld [vmem:[%s5 + $0x88] sm:$0xf]
  %v2953 = vld [vmem:[%s5 + $0x8c] sm:$0xf]
  %v2954 = vld [vmem:[%s5 + $0x90] sm:$0xf]
  %v2955 = vld [vmem:[%s5 + $0x94] sm:$0xf]
  %v2956 = vld [vmem:[%s5 + $0x98] sm:$0xf]
  %v2957 = vld [vmem:[%s5 + $0x9c] sm:$0xf]
  %v2958 = vld [vmem:[%s5 + $0xa0] sm:$0xf]
  %v2959 = vld [vmem:[%s5 + $0xa4] sm:$0xf]
  %v2960 = vld [vmem:[%s5 + $0xa8] sm:$0xf]
  %v2961 = vld [vmem:[%s5 + $0xac] sm:$0xf]
  %v2962 = vld [vmem:[%s5 + $0xb0] sm:$0xf]
  %v2963 = vld [vmem:[%s5 + $0xb4] sm:$0xf]
  %v2964 = vld [vmem:[%s5 + $0xb8] sm:$0xf]
  %v2965 = vld [vmem:[%s5 + $0xbc] sm:$0xf]
  %v2966 = vld [vmem:[%s5 + $0xc0] sm:$0xf]
  %v2967 = vld [vmem:[%s5 + $0xc4] sm:$0xf]
  %v2968 = vld [vmem:[%s5 + $0xc8] sm:$0xf]
  %v2969 = vld [vmem:[%s5 + $0xcc] sm:$0xf]
  %v2970 = vld [vmem:[%s5 + $0xd0] sm:$0xf]
  %v2971 = vld [vmem:[%s5 + $0xd4] sm:$0xf]
  %v2972 = vld [vmem:[%s5 + $0xd8] sm:$0xf]
  %v2973 = vld [vmem:[%s5 + $0xdc] sm:$0xf]
  %v2974 = vld [vmem:[%s5 + $0xe0] sm:$0xf]
  %v2975 = vld [vmem:[%s5 + $0xe4] sm:$0xf]
  %v2976 = vld [vmem:[%s5 + $0xe8] sm:$0xf]
  %v2977 = vld [vmem:[%s5 + $0xec] sm:$0xf]
  %v2978 = vld [vmem:[%s5 + $0xf0] sm:$0xf]
  %v2979 = vld [vmem:[%s5 + $0xf4] sm:$0xf]
  %v2980 = vld [vmem:[%s5 + $0xf8] sm:$0xf]
  %v2981 = vld [vmem:[%s5 + $0xfc] sm:$0xf]
  %v2982 = vld [vmem:[%s6] sm:$0x1]
  %v2984 = vperm.slane %v2982, 0
  %v3050 = vunpack.c.l.b16 %v2918
  %v3051 = vunpack.c.l.b16 %v2919
  %v3052 = vunpack.c.l.b16 %v2920
  %v3053 = vunpack.c.l.b16 %v2921
  %v3054 = vunpack.c.l.b16 %v2922
  %v3055 = vunpack.c.l.b16 %v2923
  %v3056 = vunpack.c.l.b16 %v2924
  %v3057 = vunpack.c.l.b16 %v2925
  %v3058 = vunpack.c.l.b16 %v2926
  %v3059 = vunpack.c.l.b16 %v2927
  %v3060 = vunpack.c.l.b16 %v2928
  %v3061 = vunpack.c.l.b16 %v2929
  %v3062 = vunpack.c.l.b16 %v2930
  %v3063 = vunpack.c.l.b16 %v2931
  %v3064 = vunpack.c.l.b16 %v2932
  %v3065 = vunpack.c.l.b16 %v2933
  %v3066 = vunpack.c.l.b16 %v2934
  %v3067 = vunpack.c.l.b16 %v2935
  %v3068 = vunpack.c.l.b16 %v2936
  %v3069 = vunpack.c.l.b16 %v2937
  %v3070 = vunpack.c.l.b16 %v2938
  %v3071 = vunpack.c.l.b16 %v2939
  %v3072 = vunpack.c.l.b16 %v2940
  %v3073 = vunpack.c.l.b16 %v2941
  %v3074 = vunpack.c.l.b16 %v2942
  %v3075 = vunpack.c.l.b16 %v2943
  %v3076 = vunpack.c.l.b16 %v2944
  %v3077 = vunpack.c.l.b16 %v2945
  %v3078 = vunpack.c.l.b16 %v2946
  %v3079 = vunpack.c.l.b16 %v2947
  %v3080 = vunpack.c.l.b16 %v2948
  %v3081 = vunpack.c.l.b16 %v2949
  %v3082 = vunpack.c.l.b16 %v2950
  %v3083 = vunpack.c.l.b16 %v2951
  %v3084 = vunpack.c.l.b16 %v2952
  %v3085 = vunpack.c.l.b16 %v2953
  %v3086 = vunpack.c.l.b16 %v2954
  %v3087 = vunpack.c.l.b16 %v2955
  %v3088 = vunpack.c.l.b16 %v2956
  %v3089 = vunpack.c.l.b16 %v2957
  %v3090 = vunpack.c.l.b16 %v2958
  %v3091 = vunpack.c.l.b16 %v2959
  %v3092 = vunpack.c.l.b16 %v2960
  %v3093 = vunpack.c.l.b16 %v2961
  %v3094 = vunpack.c.l.b16 %v2962
  %v3095 = vunpack.c.l.b16 %v2963
  %v3096 = vunpack.c.l.b16 %v2964
  %v3097 = vunpack.c.l.b16 %v2965
  %v3098 = vunpack.c.l.b16 %v2966
  %v3099 = vunpack.c.l.b16 %v2967
  %v3100 = vunpack.c.l.b16 %v2968
  %v3101 = vunpack.c.l.b16 %v2969
  %v3102 = vunpack.c.l.b16 %v2970
  %v3103 = vunpack.c.l.b16 %v2971
  %v3104 = vunpack.c.l.b16 %v2972
  %v3105 = vunpack.c.l.b16 %v2973
  %v3106 = vunpack.c.l.b16 %v2974
  %v3107 = vunpack.c.l.b16 %v2975
  %v3108 = vunpack.c.l.b16 %v2976
  %v3109 = vunpack.c.l.b16 %v2977
  %v3110 = vunpack.c.l.b16 %v2978
  %v3111 = vunpack.c.l.b16 %v2979
  %v3112 = vunpack.c.l.b16 %v2980
  %v3113 = vunpack.c.l.b16 %v2981
  %v3114 = vpack.c.b16 %v3051, %v3050
  %v3115 = vpack.c.b16 %v3053, %v3052
  %v3116 = vpack.c.b16 %v3055, %v3054
  %v3117 = vpack.c.b16 %v3057, %v3056
  %v3118 = vpack.c.b16 %v3059, %v3058
  %v3119 = vpack.c.b16 %v3061, %v3060
  %v3120 = vpack.c.b16 %v3063, %v3062
  %v3121 = vpack.c.b16 %v3065, %v3064
  %v3122 = vpack.c.b16 %v3067, %v3066
  %v3123 = vpack.c.b16 %v3069, %v3068
  %v3124 = vpack.c.b16 %v3071, %v3070
  %v3125 = vpack.c.b16 %v3073, %v3072
  %v3126 = vpack.c.b16 %v3075, %v3074
  %v3127 = vpack.c.b16 %v3077, %v3076
  %v3128 = vpack.c.b16 %v3079, %v3078
  %v3129 = vpack.c.b16 %v3081, %v3080
  %v3130 = vpack.c.b16 %v3083, %v3082
  %v3131 = vpack.c.b16 %v3085, %v3084
  %v3132 = vpack.c.b16 %v3087, %v3086
  %v3133 = vpack.c.b16 %v3089, %v3088
  %v3134 = vpack.c.b16 %v3091, %v3090
  %v3135 = vpack.c.b16 %v3093, %v3092
  %v3136 = vpack.c.b16 %v3095, %v3094
  %v3137 = vpack.c.b16 %v3097, %v3096
  %v3138 = vpack.c.b16 %v3099, %v3098
  %v3139 = vpack.c.b16 %v3101, %v3100
  %v3140 = vpack.c.b16 %v3103, %v3102
  %v3141 = vpack.c.b16 %v3105, %v3104
  %v3142 = vpack.c.b16 %v3107, %v3106
  %v3143 = vpack.c.b16 %v3109, %v3108
  %v3144 = vpack.c.b16 %v3111, %v3110
  %v3145 = vpack.c.b16 %v3113, %v3112
  %3178 = vmatpush.bf16.msra.mxu0 %v3121
  %3179 = vmatpush.bf16.msra.mxu0 %v3120
  %3180 = vmatpush.bf16.msra.mxu0 %v3119
  %3181 = vmatpush.bf16.msra.mxu0 %v3118
  %3182 = vmatpush.bf16.msra.mxu0 %v3117
  %3183 = vmatpush.bf16.msra.mxu0 %v3116
  %3184 = vmatpush.bf16.msra.mxu0 %v3115
  %3185 = vmatpush.bf16.msra.mxu0 %v3114
  %3186 = vmatmul.bf16.gmra.mxu0 %v2910
  %v3187 = vpop.f32.mrf.mxu0
  %v3188 = vadd.f32 %v2984, %v3187
  %v3189 = vpop.f32.mrf.mxu0
  %v3190 = vadd.f32 %v2984, %v3189
  %3191 = vmatmul.bf16.gmra.mxu0 %v2914
  %v3192 = vpop.f32.mrf.mxu0
  %v3193 = vadd.f32 %v2984, %v3192
  %v3194 = vpop.f32.mrf.mxu0
  %v3195 = vadd.f32 %v2984, %v3194
  %3196 = vdwg.mxu0
  %3197 = vmatpush.bf16.msra.mxu0 %v3129
  %3198 = vmatpush.bf16.msra.mxu0 %v3128
  %3199 = vmatpush.bf16.msra.mxu0 %v3127
  %3200 = vmatpush.bf16.msra.mxu0 %v3126
  %3201 = vmatpush.bf16.msra.mxu0 %v3125
  %3202 = vmatpush.bf16.msra.mxu0 %v3124
  %3203 = vmatpush.bf16.msra.mxu0 %v3123
  %3204 = vmatpush.bf16.msra.mxu0 %v3122
  %3205 = vmatmul.bf16.gmra.mxu0 %v2911
  %v3206 = vpop.f32.mrf.mxu0
  %v3207 = vadd.f32 %v3188, %v3206
  %v3208 = vpop.f32.mrf.mxu0
  %v3209 = vadd.f32 %v3190, %v3208
  %3210 = vmatmul.bf16.gmra.mxu0 %v2915
  %v3211 = vpop.f32.mrf.mxu0
  %v3212 = vadd.f32 %v3193, %v3211
  %v3213 = vpop.f32.mrf.mxu0
  %v3214 = vadd.f32 %v3195, %v3213
  %3215 = vdwg.mxu0
  %3216 = vmatpush.bf16.msra.mxu0 %v3137
  %3217 = vmatpush.bf16.msra.mxu0 %v3136
  %3218 = vmatpush.bf16.msra.mxu0 %v3135
  %3219 = vmatpush.bf16.msra.mxu0 %v3134
  %3220 = vmatpush.bf16.msra.mxu0 %v3133
  %3221 = vmatpush.bf16.msra.mxu0 %v3132
  %3222 = vmatpush.bf16.msra.mxu0 %v3131
  %3223 = vmatpush.bf16.msra.mxu0 %v3130
  %3224 = vmatmul.bf16.gmra.mxu0 %v2912
  %v3225 = vpop.f32.mrf.mxu0
  %v3226 = vadd.f32 %v3207, %v3225
  %v3227 = vpop.f32.mrf.mxu0
  %v3228 = vadd.f32 %v3209, %v3227
  %3229 = vmatmul.bf16.gmra.mxu0 %v2916
  %v3230 = vpop.f32.mrf.mxu0
  %v3231 = vadd.f32 %v3212, %v3230
  %v3232 = vpop.f32.mrf.mxu0
  %v3233 = vadd.f32 %v3214, %v3232
  %3234 = vdwg.mxu0
  %3235 = vmatpush.bf16.msra.mxu0 %v3145
  %3236 = vmatpush.bf16.msra.mxu0 %v3144
  %3237 = vmatpush.bf16.msra.mxu0 %v3143
  %3238 = vmatpush.bf16.msra.mxu0 %v3142
  %3239 = vmatpush.bf16.msra.mxu0 %v3141
  %3240 = vmatpush.bf16.msra.mxu0 %v3140
  %3241 = vmatpush.bf16.msra.mxu0 %v3139
  %3242 = vmatpush.bf16.msra.mxu0 %v3138
  %3243 = vmatmul.bf16.gmra.mxu0 %v2913
  %v3244 = vpop.f32.mrf.mxu0
  %v3245 = vadd.f32 %v3226, %v3244
  %v3246 = vpop.f32.mrf.mxu0
  %v3247 = vadd.f32 %v3228, %v3246
  %3248 = vmatmul.bf16.gmra.mxu0 %v2917
  %v3249 = vpop.f32.mrf.mxu0
  %v3250 = vadd.f32 %v3231, %v3249
  %v3251 = vpop.f32.mrf.mxu0
  %v3252 = vadd.f32 %v3233, %v3251
  %3253 = vdwg.mxu0
  %vm3254 = vcmp.gt.f32.partialorder %v3245, 0.0
  %vm3255 = vcmp.gt.f32.partialorder %v3247, 0.0
  %vm3256 = vcmp.gt.f32.partialorder %v3250, 0.0
  %vm3257 = vcmp.gt.f32.partialorder %v3252, 0.0
  %v3258 = vmin.f32 %v3245, 0.0
  %v3259 = vmin.f32 %v3247, 0.0
  %v3260 = vmin.f32 %v3250, 0.0
  %v3261 = vmin.f32 %v3252, 0.0
  %v3262 = vmul.f32 %v3258, 1.442695
  %v3263 = vpow.pop %v3262
  %v3264 = vmul.f32 %v3259, 1.442695
  %v3265 = vpow.pop %v3264
  %v3266 = vmul.f32 %v3260, 1.442695
  %v3267 = vpow.pop %v3266
  %v3268 = vmul.f32 %v3261, 1.442695
  %v3269 = vpow.pop %v3268
  %v3270 = vsub.f32 %v3263, 1.0
  %v3271 = vsub.f32 %v3265, 1.0
  %v3272 = vsub.f32 %v3267, 1.0
  %v3273 = vsub.f32 %v3269, 1.0
  %v3274 = vsel %vm3254, %v3245, %v3270
  %v3275 = vsel %vm3255, %v3247, %v3271
  %v3276 = vsel %vm3256, %v3250, %v3272
  %v3277 = vsel %vm3257, %v3252, %v3273
  %3278 = vst [vmem:[%s7] sm:$0xff] %v3274
  %3279 = vst [vmem:[%s7 + $0x8] sm:$0xff] %v3275
  %3280 = vst [vmem:[%s7 + $0x10] sm:$0xff] %v3276
  %3281 = vst [vmem:[%s7 + $0x18] sm:$0xff] %v3277
  // Predicated region
  $region30: #{adda_mlp_encoder.1} parent=0 // pred_check
    _
  $region31: #{adda_mlp_encoder.1} parent=0 // pred_check_branch
    %3283 = sbr.rel (0) target = $region33
  $region32: #{adda_mlp_encoder.1} parent=0 // pred_region
    _
  $region33: #{adda_mlp_encoder.1} parent=0 // pred_fallthru
    _
  // Predicated region
  $region34: #{adda_mlp_encoder.1} parent=0 // pred_check
    _
  $region35: #{adda_mlp_encoder.1} parent=0 // pred_check_branch
    %3285 = sbr.rel (0) target = $region37
  $region36: #{adda_mlp_encoder.1} parent=0 // pred_region
    _
  $region37: #{adda_mlp_encoder.1} parent=0 // pred_fallthru
    _

</llo_original>
